<compile_context>
chip_gen: v7x
topology: tpu7x:2x2x1
jax: 0.10.0
libtpu: 0.0.40
codegen_flags: <defaults>
</compile_context>

<pallas_src>
import functools
from math import sqrt

import jax
import jax.numpy as jnp
from jax.experimental import pallas as pl
from jax.experimental.pallas import tpu as pltpu


_NEG_BIG = -1e30  # finite "-inf" so fully-masked KV tiles don't poison the row


def _flash_attention_kernel(q_ref, k_ref, v_ref, am_ref, kl_ref, o_ref,
                            m_ref, l_ref, acc_ref, *,
                            softmax_temp, hblk, head_dim):
    # q_ref:  (1, Hblk, L, E)   k_ref: (1, Hblk, Tk, E)   v_ref: (1, Hblk, Tk, D)
    # am_ref: (L, Tk)   additive attention-mask tile (shared across batch/heads)
    # kl_ref: (1, 1, Tk) additive key-length mask tile for this batch element
    # o_ref:  (1, L, Hblk*D) lane-packed output slab
    kv = pl.program_id(2)

    @pl.when(kv == 0)
    def _():
        m_ref[...] = jnp.full(m_ref.shape, _NEG_BIG, m_ref.dtype)
        l_ref[...] = jnp.zeros(l_ref.shape, l_ref.dtype)
        acc_ref[...] = jnp.zeros(acc_ref.shape, acc_ref.dtype)

    q = q_ref[0]                                   # (Hblk, L, E)
    k = k_ref[0]                                   # (Hblk, Tk, E)
    v = v_ref[0]                                   # (Hblk, Tk, D)
    am = am_ref[...].astype(jnp.float32)[None]     # (1, L, Tk)
    kl = kl_ref[...].astype(jnp.float32)           # (1, 1, Tk)

    # QK^T contracting E directly (batched over heads) on the MXU, f32 accumulate.
    s = jnp.einsum('hle,hse->hls', q, k,
                   preferred_element_type=jnp.float32)            # (Hblk, L, Tk)
    # Matches fast-transformers / reference: softmax(temp * (QK + masks)).
    logits = softmax_temp * (s + am + kl)

    m_prev = m_ref[...]                                           # (Hblk, L, 1)
    m_new = jnp.maximum(m_prev, jnp.max(logits, axis=-1, keepdims=True))
    alpha = jnp.exp(m_prev - m_new)
    p = jnp.exp(logits - m_new)                                   # (Hblk, L, Tk)

    l_ref[...] = alpha * l_ref[...] + jnp.sum(p, axis=-1, keepdims=True)
    acc_ref[...] = alpha * acc_ref[...] + jnp.einsum(
        'hls,hsd->hld', p.astype(v.dtype), v,
        preferred_element_type=jnp.float32)                       # (Hblk, L, D)
    m_ref[...] = m_new

    @pl.when(kv == pl.num_programs(2) - 1)
    def _():
        l = l_ref[...]
        inv_l = pl.reciprocal(l, approx=True)      # EUP slot (effectively free)
        inv_l = inv_l * (2.0 - l * inv_l)          # one Newton step -> f32-exact
        out = acc_ref[...] * inv_l                 # (Hblk, L, D)
        # Pack heads into the lane-dense (L, Hblk*D) output slab (static unroll).
        for h in range(hblk):
            o_ref[0, :, h * head_dim:(h + 1) * head_dim] = out[h].astype(o_ref.dtype)


def _pick_head_block(H, D):
    """Smallest divisor of H whose packed lane width Hblk*D is a multiple of 128
    (lane-dense output store); fall back to all heads (always a legal block)."""
    for cand in range(1, H):
        if H % cand == 0 and (cand * D) % 128 == 0:
            return cand
    return H


def _pick_kv_block(S):
    """KV tile size: whole sequence when short, otherwise 512/256/128-wide tiles
    (feeds the 256x256 MXU on v6e/v7x while bounding VMEM)."""
    if S <= 512:
        return S
    for cand in (512, 256, 128):
        if S % cand == 0:
            return cand
    return S  # TODO(synk): pad ragged S instead of one giant tile


def full_attention(queries, keys, values, attn_mask_additive,
                   key_lengths_additive, softmax_temp=None, dropout_rate=0.1):
    """Pallas implementation of FullAttention.forward (eval mode).

    queries: (N, L, H, E)   keys: (N, S, H, E)   values: (N, S, H, D)
    attn_mask_additive: (L, S)   key_lengths_additive: (N, S)
    Returns (N, L, H, D).
    """
    del dropout_rate  # eval mode: dropout is identity
    N, L, H, E = queries.shape
    _, S, _, D = values.shape
    temp = float(softmax_temp) if softmax_temp is not None else 1.0 / sqrt(E)

    # Head-major inputs (three input passes, accepted by the review); the output
    # is written lane-packed so NO output transpose pass is needed.
    q = jnp.transpose(queries, (0, 2, 1, 3))   # (N, H, L, E)
    k = jnp.transpose(keys, (0, 2, 1, 3))      # (N, H, S, E)
    v = jnp.transpose(values, (0, 2, 1, 3))    # (N, H, S, D)
    am = attn_mask_additive.astype(jnp.float32)                    # (L, S)
    kl = key_lengths_additive.reshape(N, 1, S).astype(jnp.float32)  # (N, 1, S)

    hblk = _pick_head_block(H, D)
    tk = _pick_kv_block(S)
    assert H % hblk == 0 and S % tk == 0
    n_hb = H // hblk
    n_kv = S // tk

    kernel = functools.partial(_flash_attention_kernel,
                               softmax_temp=temp, hblk=hblk, head_dim=D)

    flops = 2 * N * H * L * S * (E + D)
    bytes_accessed = int(q.size * q.dtype.itemsize + k.size * k.dtype.itemsize
                         + v.size * v.dtype.itemsize + am.size * 4 + kl.size * 4
                         + N * L * H * D * queries.dtype.itemsize)
    cost = pl.CostEstimate(flops=flops, transcendentals=N * H * L * S,
                           bytes_accessed=bytes_accessed)

    out = pl.pallas_call(
        kernel,
        out_shape=jax.ShapeDtypeStruct((N, L, H * D), queries.dtype),
        grid_spec=pltpu.PrefetchScalarGridSpec(
            num_scalar_prefetch=0,
            grid=(N, n_hb, n_kv),
            in_specs=[
                pl.BlockSpec((1, hblk, L, E), lambda n, hb, kv: (n, hb, 0, 0)),
                pl.BlockSpec((1, hblk, tk, E), lambda n, hb, kv: (n, hb, kv, 0)),
                pl.BlockSpec((1, hblk, tk, D), lambda n, hb, kv: (n, hb, kv, 0)),
                pl.BlockSpec((L, tk), lambda n, hb, kv: (0, kv)),
                pl.BlockSpec((1, 1, tk), lambda n, hb, kv: (n, 0, kv)),
            ],
            out_specs=pl.BlockSpec((1, L, hblk * D), lambda n, hb, kv: (n, 0, hb)),
            scratch_shapes=[
                pltpu.VMEM((hblk, L, 1), jnp.float32),   # running max m
                pltpu.VMEM((hblk, L, 1), jnp.float32),   # running denom l
                pltpu.VMEM((hblk, L, D), jnp.float32),   # output accumulator
            ],
        ),
        compiler_params=pltpu.CompilerParams(
            # Two parallel axes keep both v7x TensorCores busy; the KV axis
            # carries the online-softmax accumulator so it must be "arbitrary".
            dimension_semantics=("parallel", "parallel", "arbitrary"),
            # Above the 16/32 MiB scoped defaults, under v7x's 64 MiB physical.
            vmem_limit_bytes=48 * 1024 * 1024,
        ),
        cost_estimate=cost,
    )(q, k, v, am, kl)

    return out.reshape(N, L, H, D)   # free, contiguous (no HBM transpose pass)


def _reference(queries, keys, values, attn_mask_additive,
               key_lengths_additive, softmax_temp=None):
    N, L, H, E = queries.shape
    temp = softmax_temp if softmax_temp is not None else 1.0 / sqrt(E)
    qk = jnp.einsum('nlhe,nshe->nhls', queries, keys)
    qk = qk + attn_mask_additive[None, None]
    qk = qk + key_lengths_additive[:, None, None]
    a = jax.nn.softmax(temp * qk, axis=-1)
    return jnp.einsum('nhls,nshd->nlhd', a, values)


if __name__ == "__main__":
    key = jax.random.PRNGKey(0)
    N, L, S, H, E, D = 2, 8, 8, 4, 32, 32

    kq, kk, kv = jax.random.split(key, 3)
    queries = jax.random.normal(kq, (N, L, H, E), dtype=jnp.float32)
    keys = jax.random.normal(kk, (N, S, H, E), dtype=jnp.float32)
    values = jax.random.normal(kv, (N, S, H, D), dtype=jnp.float32)

    # attn_mask: FullMask of all ones -> additive matrix of zeros.
    attn_mask_additive = jnp.zeros((L, S), dtype=jnp.float32)
    # key_lengths: LengthMask with lengths [8, 5] -> 0 where valid, -inf where not.
    lengths = jnp.array([S, 5], dtype=jnp.int32)
    key_lengths_additive = jnp.where(
        jnp.arange(S)[None, :] < lengths[:, None], 0.0, -jnp.inf
    ).astype(jnp.float32)

    out = full_attention(queries, keys, values, attn_mask_additive,
                         key_lengths_additive)
    out = jax.block_until_ready(out)

    ref = _reference(queries, keys, values, attn_mask_additive,
                     key_lengths_additive)
    assert out.shape == (N, L, H, D)
    # Tolerance covers the EUP reciprocal (+Newton) and online-softmax ordering.
    assert jnp.allclose(out, ref, atol=1e-3, rtol=1e-3), "mismatch vs reference"

    print("KERNEL_OK")
</pallas_src>

<mosaic_0001>
module attributes {stable_mosaic.version = 11 : i64} {
  func.func @_flash_attention_kernel(%arg0: i32, %arg1: i32, %arg2: i32, %arg3: memref<1x4x8x32xf32, #tpu.memory_space<vmem>>, %arg4: memref<1x4x8x32xf32, #tpu.memory_space<vmem>>, %arg5: memref<1x4x8x32xf32, #tpu.memory_space<vmem>>, %arg6: memref<8x8xf32, #tpu.memory_space<vmem>>, %arg7: memref<1x1x8xf32, #tpu.memory_space<vmem>>, %arg8: memref<1x8x128xf32, #tpu.memory_space<vmem>>, %arg9: memref<4x8x1xf32, #tpu.memory_space<vmem>>, %arg10: memref<4x8x1xf32, #tpu.memory_space<vmem>>, %arg11: memref<4x8x32xf32, #tpu.memory_space<vmem>>) attributes {dimension_semantics = [#tpu.dimension_semantics<parallel>, #tpu.dimension_semantics<parallel>, #tpu.dimension_semantics<arbitrary>], iteration_bounds = array<i64: 2, 1, 1>, scalar_prefetch = 0 : i64, scratch_operands = 3 : i64, tpu.core_type = #tpu.core_type<tc>, window_params = [{transform_indices = @transform_0, window_bounds = array<i64: 1, 4, 8, 32>}, {transform_indices = @transform_1, window_bounds = array<i64: 1, 4, 8, 32>}, {transform_indices = @transform_2, window_bounds = array<i64: 1, 4, 8, 32>}, {transform_indices = @transform_3, window_bounds = array<i64: 8, 8>}, {transform_indices = @transform_4, window_bounds = array<i64: 1, 1, 8>}, {transform_indices = @transform_5, window_bounds = array<i64: 1, 8, 128>}]} {
    %c0_i32 = arith.constant 0 : i32
    %0 = arith.cmpi eq, %arg2, %c0_i32 : i32
    %1 = arith.extui %0 : i1 to i32
    %c0_i32_0 = arith.constant 0 : i32
    %2 = arith.cmpi ne, %1, %c0_i32_0 : i32
    scf.if %2 {
      %cst_41 = arith.constant -1.000000e+30 : f32
      %44 = vector.broadcast %cst_41 : f32 to vector<4x8x1xf32>
      %c0_42 = arith.constant 0 : index
      %c0_43 = arith.constant 0 : index
      %c0_44 = arith.constant 0 : index
      %45 = vector.load %arg9[%c0_42, %c0_43, %c0_44] : memref<4x8x1xf32, #tpu.memory_space<vmem>>, vector<4x8x1xf32>
      tpu.vector_store %arg9[%c0_42, %c0_43, %c0_44], %44 {strides = array<i32>} : memref<4x8x1xf32, #tpu.memory_space<vmem>>, vector<4x8x1xf32>,
      %cst_45 = arith.constant 0.000000e+00 : f32
      %46 = vector.broadcast %cst_45 : f32 to vector<4x8x1xf32>
      %c0_46 = arith.constant 0 : index
      %c0_47 = arith.constant 0 : index
      %c0_48 = arith.constant 0 : index
      %47 = vector.load %arg10[%c0_46, %c0_47, %c0_48] : memref<4x8x1xf32, #tpu.memory_space<vmem>>, vector<4x8x1xf32>
      tpu.vector_store %arg10[%c0_46, %c0_47, %c0_48], %46 {strides = array<i32>} : memref<4x8x1xf32, #tpu.memory_space<vmem>>, vector<4x8x1xf32>,
      %cst_49 = arith.constant 0.000000e+00 : f32
      %48 = vector.broadcast %cst_49 : f32 to vector<4x8x32xf32>
      %c0_50 = arith.constant 0 : index
      %c0_51 = arith.constant 0 : index
      %c0_52 = arith.constant 0 : index
      %49 = vector.load %arg11[%c0_50, %c0_51, %c0_52] : memref<4x8x32xf32, #tpu.memory_space<vmem>>, vector<4x8x32xf32>
      tpu.vector_store %arg11[%c0_50, %c0_51, %c0_52], %48 {strides = array<i32>} : memref<4x8x32xf32, #tpu.memory_space<vmem>>, vector<4x8x32xf32>,
    } else {
    }
    %c0 = arith.constant 0 : index
    %c0_1 = arith.constant 0 : index
    %c0_2 = arith.constant 0 : index
    %c0_3 = arith.constant 0 : index
    %3 = vector.load %arg3[%c0, %c0_1, %c0_2, %c0_3] : memref<1x4x8x32xf32, #tpu.memory_space<vmem>>, vector<1x4x8x32xf32>
    %4 = vector.shape_cast %3 : vector<1x4x8x32xf32> to vector<4x8x32xf32>
    %c0_4 = arith.constant 0 : index
    %c0_5 = arith.constant 0 : index
    %c0_6 = arith.constant 0 : index
    %c0_7 = arith.constant 0 : index
    %5 = vector.load %arg4[%c0_4, %c0_5, %c0_6, %c0_7] : memref<1x4x8x32xf32, #tpu.memory_space<vmem>>, vector<1x4x8x32xf32>
    %6 = vector.shape_cast %5 : vector<1x4x8x32xf32> to vector<4x8x32xf32>
    %c0_8 = arith.constant 0 : index
    %c0_9 = arith.constant 0 : index
    %c0_10 = arith.constant 0 : index
    %c0_11 = arith.constant 0 : index
    %7 = vector.load %arg5[%c0_8, %c0_9, %c0_10, %c0_11] : memref<1x4x8x32xf32, #tpu.memory_space<vmem>>, vector<1x4x8x32xf32>
    %8 = vector.shape_cast %7 : vector<1x4x8x32xf32> to vector<4x8x32xf32>
    %c0_12 = arith.constant 0 : index
    %c0_13 = arith.constant 0 : index
    %9 = vector.load %arg6[%c0_12, %c0_13] : memref<8x8xf32, #tpu.memory_space<vmem>>, vector<8x8xf32>
    %10 = vector.shape_cast %9 : vector<8x8xf32> to vector<1x8x8xf32>
    %c0_14 = arith.constant 0 : index
    %c0_15 = arith.constant 0 : index
    %c0_16 = arith.constant 0 : index
    %11 = vector.load %arg7[%c0_14, %c0_15, %c0_16] : memref<1x1x8xf32, #tpu.memory_space<vmem>>, vector<1x1x8xf32>
    "tpu.trace_start"() <{level = 10 : i32, message = "hle,hse->hls"}> : () -> ()
    %cst = arith.constant dense<0.000000e+00> : vector<4x8x8xf32>
    %12 = tpu.matmul %4, %6, %cst {dimension_numbers = #tpu.dot_dimension_numbers<[2], [2], [1], [1], [0, 0, 0, 1, 1, 1], [0], [0]>} : vector<4x8x32xf32>, vector<4x8x32xf32>, vector<4x8x8xf32> -> vector<4x8x8xf32>
    "tpu.trace_stop"() : () -> ()
    %13 = vector.broadcast %10 : vector<1x8x8xf32> to vector<4x8x8xf32>
    %14 = arith.addf %12, %13 : vector<4x8x8xf32>
    %15 = vector.broadcast %11 : vector<1x1x8xf32> to vector<4x8x8xf32>
    %16 = arith.addf %14, %15 : vector<4x8x8xf32>
    %cst_17 = arith.constant 0.176776692 : f32
    %17 = vector.broadcast %cst_17 : f32 to vector<4x8x8xf32>
    %18 = arith.mulf %17, %16 : vector<4x8x8xf32>
    %c0_18 = arith.constant 0 : index
    %c0_19 = arith.constant 0 : index
    %c0_20 = arith.constant 0 : index
    %19 = vector.load %arg9[%c0_18, %c0_19, %c0_20] : memref<4x8x1xf32, #tpu.memory_space<vmem>>, vector<4x8x1xf32>
    %cst_21 = arith.constant dense<0xFF800000> : vector<4x8xf32>
    %20 = vector.multi_reduction <maximumf>, %18, %cst_21 [2] : vector<4x8x8xf32> to vector<4x8xf32>
    %21 = vector.shape_cast %20 : vector<4x8xf32> to vector<4x8x1xf32>
    %22 = arith.maximumf %19, %21 : vector<4x8x1xf32>
    %23 = arith.subf %19, %22 : vector<4x8x1xf32>
    %24 = math.exp %23 : vector<4x8x1xf32>
    %25 = vector.broadcast %22 : vector<4x8x1xf32> to vector<4x8x8xf32>
    %26 = arith.subf %18, %25 : vector<4x8x8xf32>
    %27 = math.exp %26 : vector<4x8x8xf32>
    %c0_22 = arith.constant 0 : index
    %c0_23 = arith.constant 0 : index
    %c0_24 = arith.constant 0 : index
    %28 = vector.load %arg10[%c0_22, %c0_23, %c0_24] : memref<4x8x1xf32, #tpu.memory_space<vmem>>, vector<4x8x1xf32>
    %29 = arith.mulf %24, %28 : vector<4x8x1xf32>
    %cst_25 = arith.constant dense<0.000000e+00> : vector<4x8xf32>
    %30 = vector.multi_reduction <add>, %27, %cst_25 [2] : vector<4x8x8xf32> to vector<4x8xf32>
    %31 = vector.shape_cast %30 : vector<4x8xf32> to vector<4x8x1xf32>
    %32 = arith.addf %29, %31 : vector<4x8x1xf32>
    %c0_26 = arith.constant 0 : index
    %c0_27 = arith.constant 0 : index
    %c0_28 = arith.constant 0 : index
    %33 = vector.load %arg10[%c0_26, %c0_27, %c0_28] : memref<4x8x1xf32, #tpu.memory_space<vmem>>, vector<4x8x1xf32>
    tpu.vector_store %arg10[%c0_26, %c0_27, %c0_28], %32 {strides = array<i32>} : memref<4x8x1xf32, #tpu.memory_space<vmem>>, vector<4x8x1xf32>,
    %c0_29 = arith.constant 0 : index
    %c0_30 = arith.constant 0 : index
    %c0_31 = arith.constant 0 : index
    %34 = vector.load %arg11[%c0_29, %c0_30, %c0_31] : memref<4x8x32xf32, #tpu.memory_space<vmem>>, vector<4x8x32xf32>
    %35 = vector.broadcast %24 : vector<4x8x1xf32> to vector<4x8x32xf32>
    %36 = arith.mulf %35, %34 : vector<4x8x32xf32>
    "tpu.trace_start"() <{level = 10 : i32, message = "hls,hsd->hld"}> : () -> ()
    %cst_32 = arith.constant dense<0.000000e+00> : vector<4x8x32xf32>
    %37 = tpu.matmul %27, %8, %cst_32 {dimension_numbers = #tpu.dot_dimension_numbers<[2], [1], [1], [2], [0, 0, 0, 1, 1, 2], [0], [0]>} : vector<4x8x8xf32>, vector<4x8x32xf32>, vector<4x8x32xf32> -> vector<4x8x32xf32>
    "tpu.trace_stop"() : () -> ()
    %38 = arith.addf %36, %37 : vector<4x8x32xf32>
    %c0_33 = arith.constant 0 : index
    %c0_34 = arith.constant 0 : index
    %c0_35 = arith.constant 0 : index
    %39 = vector.load %arg11[%c0_33, %c0_34, %c0_35] : memref<4x8x32xf32, #tpu.memory_space<vmem>>, vector<4x8x32xf32>
    tpu.vector_store %arg11[%c0_33, %c0_34, %c0_35], %38 {strides = array<i32>} : memref<4x8x32xf32, #tpu.memory_space<vmem>>, vector<4x8x32xf32>,
    %c0_36 = arith.constant 0 : index
    %c0_37 = arith.constant 0 : index
    %c0_38 = arith.constant 0 : index
    %40 = vector.load %arg9[%c0_36, %c0_37, %c0_38] : memref<4x8x1xf32, #tpu.memory_space<vmem>>, vector<4x8x1xf32>
    tpu.vector_store %arg9[%c0_36, %c0_37, %c0_38], %22 {strides = array<i32>} : memref<4x8x1xf32, #tpu.memory_space<vmem>>, vector<4x8x1xf32>,
    %c0_i32_39 = arith.constant 0 : i32
    %41 = arith.cmpi eq, %arg2, %c0_i32_39 : i32
    %42 = arith.extui %41 : i1 to i32
    %c0_i32_40 = arith.constant 0 : i32
    %43 = arith.cmpi ne, %42, %c0_i32_40 : i32
    scf.if %43 {
      %c0_41 = arith.constant 0 : index
      %c0_42 = arith.constant 0 : index
      %c0_43 = arith.constant 0 : index
      %44 = vector.load %arg10[%c0_41, %c0_42, %c0_43] : memref<4x8x1xf32, #tpu.memory_space<vmem>>, vector<4x8x1xf32>
      %45 = tpu.reciprocal %44 {approx = true} : vector<4x8x1xf32> -> vector<4x8x1xf32>
      %46 = arith.mulf %44, %45 : vector<4x8x1xf32>
      %cst_44 = arith.constant 2.000000e+00 : f32
      %47 = vector.broadcast %cst_44 : f32 to vector<4x8x1xf32>
      %48 = arith.subf %47, %46 : vector<4x8x1xf32>
      %49 = arith.mulf %45, %48 : vector<4x8x1xf32>
      %c0_45 = arith.constant 0 : index
      %c0_46 = arith.constant 0 : index
      %c0_47 = arith.constant 0 : index
      %50 = vector.load %arg11[%c0_45, %c0_46, %c0_47] : memref<4x8x32xf32, #tpu.memory_space<vmem>>, vector<4x8x32xf32>
      %51 = vector.broadcast %49 : vector<4x8x1xf32> to vector<4x8x32xf32>
      %52 = arith.mulf %50, %51 : vector<4x8x32xf32>
      %53 = vector.extract_strided_slice %52 {offsets = [0, 0, 0], sizes = [1, 8, 32], strides = [1, 1, 1]} : vector<4x8x32xf32> to vector<1x8x32xf32>
      %54 = vector.shape_cast %53 : vector<1x8x32xf32> to vector<8x32xf32>
      %c0_48 = arith.constant 0 : index
      %c0_49 = arith.constant 0 : index
      %c0_50 = arith.constant 0 : index
      %55 = vector.load %arg8[%c0_48, %c0_49, %c0_50] : memref<1x8x128xf32, #tpu.memory_space<vmem>>, vector<1x8x32xf32>
      %56 = vector.shape_cast %55 : vector<1x8x32xf32> to vector<8x32xf32>
      %57 = vector.shape_cast %54 : vector<8x32xf32> to vector<1x8x32xf32>
      tpu.vector_store %arg8[%c0_48, %c0_49, %c0_50], %57 {strides = array<i32>} : memref<1x8x128xf32, #tpu.memory_space<vmem>>, vector<1x8x32xf32>,
      %58 = vector.extract_strided_slice %52 {offsets = [1, 0, 0], sizes = [1, 8, 32], strides = [1, 1, 1]} : vector<4x8x32xf32> to vector<1x8x32xf32>
      %59 = vector.shape_cast %58 : vector<1x8x32xf32> to vector<8x32xf32>
      %c0_51 = arith.constant 0 : index
      %c0_52 = arith.constant 0 : index
      %c32 = arith.constant 32 : index
      %60 = vector.load %arg8[%c0_51, %c0_52, %c32] : memref<1x8x128xf32, #tpu.memory_space<vmem>>, vector<1x8x32xf32>
      %61 = vector.shape_cast %60 : vector<1x8x32xf32> to vector<8x32xf32>
      %62 = vector.shape_cast %59 : vector<8x32xf32> to vector<1x8x32xf32>
      tpu.vector_store %arg8[%c0_51, %c0_52, %c32], %62 {strides = array<i32>} : memref<1x8x128xf32, #tpu.memory_space<vmem>>, vector<1x8x32xf32>,
      %63 = vector.extract_strided_slice %52 {offsets = [2, 0, 0], sizes = [1, 8, 32], strides = [1, 1, 1]} : vector<4x8x32xf32> to vector<1x8x32xf32>
      %64 = vector.shape_cast %63 : vector<1x8x32xf32> to vector<8x32xf32>
      %c0_53 = arith.constant 0 : index
      %c0_54 = arith.constant 0 : index
      %c64 = arith.constant 64 : index
      %65 = vector.load %arg8[%c0_53, %c0_54, %c64] : memref<1x8x128xf32, #tpu.memory_space<vmem>>, vector<1x8x32xf32>
      %66 = vector.shape_cast %65 : vector<1x8x32xf32> to vector<8x32xf32>
      %67 = vector.shape_cast %64 : vector<8x32xf32> to vector<1x8x32xf32>
      tpu.vector_store %arg8[%c0_53, %c0_54, %c64], %67 {strides = array<i32>} : memref<1x8x128xf32, #tpu.memory_space<vmem>>, vector<1x8x32xf32>,
      %68 = vector.extract_strided_slice %52 {offsets = [3, 0, 0], sizes = [1, 8, 32], strides = [1, 1, 1]} : vector<4x8x32xf32> to vector<1x8x32xf32>
      %69 = vector.shape_cast %68 : vector<1x8x32xf32> to vector<8x32xf32>
      %c0_55 = arith.constant 0 : index
      %c0_56 = arith.constant 0 : index
      %c96 = arith.constant 96 : index
      %70 = vector.load %arg8[%c0_55, %c0_56, %c96] : memref<1x8x128xf32, #tpu.memory_space<vmem>>, vector<1x8x32xf32>
      %71 = vector.shape_cast %70 : vector<1x8x32xf32> to vector<8x32xf32>
      %72 = vector.shape_cast %69 : vector<8x32xf32> to vector<1x8x32xf32>
      tpu.vector_store %arg8[%c0_55, %c0_56, %c96], %72 {strides = array<i32>} : memref<1x8x128xf32, #tpu.memory_space<vmem>>, vector<1x8x32xf32>,
    } else {
    }
    return
  }
  func.func @transform_0(%arg0: i32, %arg1: i32, %arg2: i32) -> (i32, i32, i32, i32) {
    %c0_i32 = arith.constant 0 : i32
    %c0_i32_0 = arith.constant 0 : i32
    %c0_i32_1 = arith.constant 0 : i32
    return %arg0, %arg1, %c0_i32, %c0_i32_0 : i32, i32, i32, i32
  }
  func.func @transform_1(%arg0: i32, %arg1: i32, %arg2: i32) -> (i32, i32, i32, i32) {
    %c0_i32 = arith.constant 0 : i32
    %c0_i32_0 = arith.constant 0 : i32
    return %arg0, %arg1, %arg2, %c0_i32 : i32, i32, i32, i32
  }
  func.func @transform_2(%arg0: i32, %arg1: i32, %arg2: i32) -> (i32, i32, i32, i32) {
    %c0_i32 = arith.constant 0 : i32
    %c0_i32_0 = arith.constant 0 : i32
    return %arg0, %arg1, %arg2, %c0_i32 : i32, i32, i32, i32
  }
  func.func @transform_3(%arg0: i32, %arg1: i32, %arg2: i32) -> (i32, i32) {
    %c0_i32 = arith.constant 0 : i32
    %c0_i32_0 = arith.constant 0 : i32
    return %c0_i32, %arg2 : i32, i32
  }
  func.func @transform_4(%arg0: i32, %arg1: i32, %arg2: i32) -> (i32, i32, i32) {
    %c0_i32 = arith.constant 0 : i32
    %c0_i32_0 = arith.constant 0 : i32
    return %arg0, %c0_i32, %arg2 : i32, i32, i32
  }
  func.func @transform_5(%arg0: i32, %arg1: i32, %arg2: i32) -> (i32, i32, i32) {
    %c0_i32 = arith.constant 0 : i32
    %c0_i32_0 = arith.constant 0 : i32
    return %arg0, %c0_i32, %arg1 : i32, i32, i32
  }
}

</mosaic_0001>

<llo_original>
// kernel: tpu_custom_call.1
$region0: #{tpu_custom_call.1}
  #allocation0 [shape = 'u32[]', space=smem, size = 0x4, offset = 0x4, fixed_abs, tag = 'smem constant byte address 0x4 - core index']
  #allocation1 [shape = 'u32[144,128]{1,0:T(1,128)}', space=vmem, size = 0x12000, scoped, tag = 'internal scratch']
  #allocation2 [shape = 'f32[4,8,1]{2,1,0:T(8,128)}', space=vmem, size = 0x4000, scoped, tag = 'scratch operand']
  #allocation3 [shape = 'f32[4,8,1]{2,1,0:T(8,128)}', space=vmem, size = 0x4000, scoped, tag = 'scratch operand']
  #allocation4 [shape = 'f32[4,8,32]{2,1,0:T(8,128)}', space=vmem, size = 0x4000, scoped, tag = 'scratch operand']
  %s0 = inlined_call_operand.hbm [shape: f32[2,4,8,32], index: 0, kind: input, shape index: {}]
  %s1 = inlined_call_operand.hbm [shape: f32[2,4,8,32], index: 1, kind: input, shape index: {}]
  %s2 = inlined_call_operand.hbm [shape: f32[2,4,8,32], index: 2, kind: input, shape index: {}]
  %s3 = inlined_call_operand.vmem [shape: f32[8,8], index: 3, kind: input, shape index: {}]
  %s4 = inlined_call_operand.vmem [shape: f32[2,1,8], index: 4, kind: input, shape index: {}]
  %s5 = inlined_call_operand.hbm [shape: f32[2,8,128], index: 5, kind: output, shape index: {}]
  %s6 = sld [smem:[#allocation0]]
  $region73: #{tpu_custom_call.1} parent=0
    _
  %s8 = ssub.s32 1, %s6
  %s9 = scalar_select 0, %s8, %s6
  $region1: #{tpu_custom_call.1} parent=0
    #allocation5 [shape = 'u8[32768]{0}', space=vmem, size = 0x8000, scoped, tag = 'input window, operand 0']
    #allocation6 [shape = 's32[2]{0}', space=sflag, size = 0x8, scoped, tag = 'scoped memory for tpu_custom_call.1']
    #allocation7 [shape = 's32[2]{0}', space=sflag, size = 0x8, scoped, tag = 'scoped memory for tpu_custom_call.1']
    #allocation8 [shape = 'u8[32768]{0}', space=vmem, size = 0x8000, scoped, tag = 'input window, operand 1']
    #allocation9 [shape = 's32[2]{0}', space=sflag, size = 0x8, scoped, tag = 'scoped memory for tpu_custom_call.1']
    #allocation10 [shape = 'u8[32768]{0}', space=vmem, size = 0x8000, scoped, tag = 'input window, operand 2']
    #allocation11 [shape = 'u8[8192]{0}', space=vmem, size = 0x2000, scoped, tag = 'output window, operand 0']
    %10 = vsyncpa [#allocation6], 0
    %s11 = scalar_lea.sflag [#allocation6], 1
    %12 = vsyncpa %s11, 0
    %13 = vsyncpa [#allocation9], 0
    %s14 = scalar_lea.sflag [#allocation9], 1
    %15 = vsyncpa %s14, 0
    %16 = vsyncpa [#allocation7], 0
    %s17 = scalar_lea.sflag [#allocation7], 1
    %18 = vsyncpa %s17, 0
    loop: start=0, step=1, limit=4
    $region2: #{tpu_custom_call.1} parent=1 // loop_pre_header
      _
    $region3: #{tpu_custom_call.1} parent=1 // loop_header
      %s20 = sphi 0, %s24
      %p21 = scmp.ge.s32.totalorder %s20, 4
      %s27 = sphi 0, %s46
      %s28 = sphi 0, %s42
      %s29 = sphi 0, %s38
      %s30 = sphi 0, %s27
      %s31 = sphi 0, %s28
      %s32 = sphi 0, %s29
      %s33 = sphi 0, %s30
      %s34 = sphi 0, %s31
      %s35 = sphi 0, %s32
      %s51 = sphi 0, %s53
      %s54 = sphi 0, %s51
      %s55 = sphi 0, %s54
      %s71 = sphi 0, %s55
      %s81 = sphi 0, %s83
      %s84 = sphi 0, %s81
      %s85 = sphi 0, %s84
      %s101 = sphi 0, %s85
      %s111 = sphi 0, %s113
      %s114 = sphi 0, %s111
      %s115 = sphi 0, %s114
      %s131 = sphi 0, %s115
      %s137 = sphi 0, %s139
      %s140 = sphi 0, %s137
      %s141 = sphi 0, %s140
      %s157 = sphi 0, %s141
      %s165 = sphi 0, %s167
      %s168 = sphi 0, %s165
      %s169 = sphi 0, %s168
      %s185 = sphi 0, %s169
      %s193 = sphi 0, %s195
      %s196 = sphi 0, %s193
      %s197 = sphi 0, %s196
      %s213 = sphi 0, %s197
    $region4: #{tpu_custom_call.1} parent=1 // loop_header_branch
      %23 = sbr.rel (%p21) target = $region8
    $region5: #{tpu_custom_call.1} parent=1 // loop_body
      %s25 = ssub.s32 %s20, 1
      %s26 = ssub.s32 %s20, 2
      %s36 = sadd.s32 1, %s29
      %p37 = scmp.ge.s32.totalorder %s36, 1
      %s38 = scalar_select %p37, 0, %s36
      %s39 = sadd.s32 1, %s28
      %s40 = scalar_select %p37, %s39, %s28
      %p41 = scmp.ge.s32.totalorder %s40, 1
      %s42 = scalar_select %p41, 0, %s40
      %s43 = sadd.s32 1, %s27
      %s44 = scalar_select %p41, %s43, %s27
      %p45 = scmp.ge.s32.totalorder %s44, 2
      %s46 = scalar_select %p45, 0, %s44
      %s47 = ssub.s32 %s27, %s46
      %s48 = ssub.s32 %s28, %s42
      %s49 = sor.u32 %s47, %s48
      %p50 = scmp.eq.s32.totalorder %s49, 0
      %s52 = sadd.s32 %s51, 1
      %s53 = scalar_select %p50, %s51, %s52
      %p56 = pneg %p50
      %p57 = scmp.eq.s32.totalorder %s20, 1
      %p58 = por %p56, %p57
      %p59 = scmp.ne.s32.totalorder %s51, %s54
      %p60 = scmp.eq.s32.totalorder %s20, 0
      %p61 = por %p59, %p60
      %p62 = scmp.ne.s32.totalorder %s51, %s54
      %p63 = scmp.eq.s32.totalorder %s25, 1
      %p64 = por %p62, %p63
      %p65 = scmp.ne.s32.totalorder %s54, %s55
      %p66 = scmp.eq.s32.totalorder %s25, 0
      %p67 = por %p65, %p66
      %p68 = scmp.ne.s32.totalorder %s54, %s55
      %p69 = scmp.eq.s32.totalorder %s26, 1
      %p70 = por %p68, %p69
      %p72 = scmp.ne.s32.totalorder %s55, %s71
      %p73 = scmp.eq.s32.totalorder %s26, 0
      %p74 = por %p72, %p73
      %s75 = ssub.s32 %s27, %s46
      %s76 = ssub.s32 %s28, %s42
      %s77 = sor.u32 %s75, %s76
      %s78 = ssub.s32 %s29, %s38
      %s79 = sor.u32 %s77, %s78
      %p80 = scmp.eq.s32.totalorder %s79, 0
      %s82 = sadd.s32 %s81, 1
      %s83 = scalar_select %p80, %s81, %s82
      %p86 = pneg %p80
      %p87 = scmp.eq.s32.totalorder %s20, 1
      %p88 = por %p86, %p87
      %p89 = scmp.ne.s32.totalorder %s81, %s84
      %p90 = scmp.eq.s32.totalorder %s20, 0
      %p91 = por %p89, %p90
      %p92 = scmp.ne.s32.totalorder %s81, %s84
      %p93 = scmp.eq.s32.totalorder %s25, 1
      %p94 = por %p92, %p93
      %p95 = scmp.ne.s32.totalorder %s84, %s85
      %p96 = scmp.eq.s32.totalorder %s25, 0
      %p97 = por %p95, %p96
      %p98 = scmp.ne.s32.totalorder %s84, %s85
      %p99 = scmp.eq.s32.totalorder %s26, 1
      %p100 = por %p98, %p99
      %p102 = scmp.ne.s32.totalorder %s85, %s101
      %p103 = scmp.eq.s32.totalorder %s26, 0
      %p104 = por %p102, %p103
      %s105 = ssub.s32 %s27, %s46
      %s106 = ssub.s32 %s28, %s42
      %s107 = sor.u32 %s105, %s106
      %s108 = ssub.s32 %s29, %s38
      %s109 = sor.u32 %s107, %s108
      %p110 = scmp.eq.s32.totalorder %s109, 0
      %s112 = sadd.s32 %s111, 1
      %s113 = scalar_select %p110, %s111, %s112
      %p116 = pneg %p110
      %p117 = scmp.eq.s32.totalorder %s20, 1
      %p118 = por %p116, %p117
      %p119 = scmp.ne.s32.totalorder %s111, %s114
      %p120 = scmp.eq.s32.totalorder %s20, 0
      %p121 = por %p119, %p120
      %p122 = scmp.ne.s32.totalorder %s111, %s114
      %p123 = scmp.eq.s32.totalorder %s25, 1
      %p124 = por %p122, %p123
      %p125 = scmp.ne.s32.totalorder %s114, %s115
      %p126 = scmp.eq.s32.totalorder %s25, 0
      %p127 = por %p125, %p126
      %p128 = scmp.ne.s32.totalorder %s114, %s115
      %p129 = scmp.eq.s32.totalorder %s26, 1
      %p130 = por %p128, %p129
      %p132 = scmp.ne.s32.totalorder %s115, %s131
      %p133 = scmp.eq.s32.totalorder %s26, 0
      %p134 = por %p132, %p133
      %s135 = ssub.s32 %s29, %s38
      %p136 = scmp.eq.s32.totalorder %s135, 0
      %s138 = sadd.s32 %s137, 1
      %s139 = scalar_select %p136, %s137, %s138
      %p142 = pneg %p136
      %p143 = scmp.eq.s32.totalorder %s20, 1
      %p144 = por %p142, %p143
      %p145 = scmp.ne.s32.totalorder %s137, %s140
      %p146 = scmp.eq.s32.totalorder %s20, 0
      %p147 = por %p145, %p146
      %p148 = scmp.ne.s32.totalorder %s137, %s140
      %p149 = scmp.eq.s32.totalorder %s25, 1
      %p150 = por %p148, %p149
      %p151 = scmp.ne.s32.totalorder %s140, %s141
      %p152 = scmp.eq.s32.totalorder %s25, 0
      %p153 = por %p151, %p152
      %p154 = scmp.ne.s32.totalorder %s140, %s141
      %p155 = scmp.eq.s32.totalorder %s26, 1
      %p156 = por %p154, %p155
      %p158 = scmp.ne.s32.totalorder %s141, %s157
      %p159 = scmp.eq.s32.totalorder %s26, 0
      %p160 = por %p158, %p159
      %s161 = ssub.s32 %s27, %s46
      %s162 = ssub.s32 %s29, %s38
      %s163 = sor.u32 %s161, %s162
      %p164 = scmp.eq.s32.totalorder %s163, 0
      %s166 = sadd.s32 %s165, 1
      %s167 = scalar_select %p164, %s165, %s166
      %p170 = pneg %p164
      %p171 = scmp.eq.s32.totalorder %s20, 1
      %p172 = por %p170, %p171
      %p173 = scmp.ne.s32.totalorder %s165, %s168
      %p174 = scmp.eq.s32.totalorder %s20, 0
      %p175 = por %p173, %p174
      %p176 = scmp.ne.s32.totalorder %s165, %s168
      %p177 = scmp.eq.s32.totalorder %s25, 1
      %p178 = por %p176, %p177
      %p179 = scmp.ne.s32.totalorder %s168, %s169
      %p180 = scmp.eq.s32.totalorder %s25, 0
      %p181 = por %p179, %p180
      %p182 = scmp.ne.s32.totalorder %s168, %s169
      %p183 = scmp.eq.s32.totalorder %s26, 1
      %p184 = por %p182, %p183
      %p186 = scmp.ne.s32.totalorder %s169, %s185
      %p187 = scmp.eq.s32.totalorder %s26, 0
      %p188 = por %p186, %p187
      %s189 = ssub.s32 %s27, %s46
      %s190 = ssub.s32 %s28, %s42
      %s191 = sor.u32 %s189, %s190
      %p192 = scmp.eq.s32.totalorder %s191, 0
      %s194 = sadd.s32 %s193, 1
      %s195 = scalar_select %p192, %s193, %s194
      %p198 = pneg %p192
      %p199 = scmp.eq.s32.totalorder %s20, 1
      %p200 = por %p198, %p199
      %p201 = scmp.ne.s32.totalorder %s193, %s196
      %p202 = scmp.eq.s32.totalorder %s20, 0
      %p203 = por %p201, %p202
      %p204 = scmp.ne.s32.totalorder %s193, %s196
      %p205 = scmp.eq.s32.totalorder %s25, 1
      %p206 = por %p204, %p205
      %p207 = scmp.ne.s32.totalorder %s196, %s197
      %p208 = scmp.eq.s32.totalorder %s25, 0
      %p209 = por %p207, %p208
      %p210 = scmp.ne.s32.totalorder %s196, %s197
      %p211 = scmp.eq.s32.totalorder %s26, 1
      %p212 = por %p210, %p211
      %p214 = scmp.ne.s32.totalorder %s197, %s213
      %p215 = scmp.eq.s32.totalorder %s26, 0
      %p216 = por %p214, %p215
      %p217 = scmp.le.s32.totalorder 1, %s20
      %p218 = scmp.lt.s32.totalorder %s20, 3
      %p219 = pnand %p217, %p218
      %p220 = pneg %p219
      // Predicated region
      $region9: #{tpu_custom_call.1} parent=5 // pred_check
        _
      $region10: #{tpu_custom_call.1} parent=5 // pred_check_branch
        %222 = sbr.rel (%p219) target = $region12
      $region11: #{tpu_custom_call.1} parent=5 // pred_region
        %s223 = ssub.s32 %s20, 1
        // Predicated region
        $region13: #{tpu_custom_call.1} parent=11 // pred_check
          %p224 = pneg %p153
        $region14: #{tpu_custom_call.1} parent=11 // pred_check_branch
          %226 = sbr.rel (%p224) target = $region16
        $region15: #{tpu_custom_call.1} parent=11 // pred_region
          %p227 = scmp.lt.s32.totalorder %s32, 0
          %s228 = scalar_select %p227, %s32, 0
          %s229 = smul.addr %s228, 8
          %s230 = scalar_lea.vmem %s3, %s229
        $region16: #{tpu_custom_call.1} parent=11 // pred_fallthru
          _
      $region12: #{tpu_custom_call.1} parent=5 // pred_fallthru
        _
      %p231 = scmp.lt.s32.totalorder %s20, 2
      // Predicated region
      $region17: #{tpu_custom_call.1} parent=5 // pred_check
        %p232 = pneg %p231
      $region18: #{tpu_custom_call.1} parent=5 // pred_check_branch
        %234 = sbr.rel (%p232) target = $region20
      $region19: #{tpu_custom_call.1} parent=5 // pred_region
        // Predicated region
        $region21: #{tpu_custom_call.1} parent=19 // pred_check
          %p235 = pneg %p61
        $region22: #{tpu_custom_call.1} parent=19 // pred_check_branch
          %237 = sbr.rel (%p235) target = $region24
        $region23: #{tpu_custom_call.1} parent=19 // pred_region
          %s238 = sand.u32 %s51, 1
          %s239 = scalar_lea.sflag [#allocation6], %s238
          %s240 = sand.u32 %s51, 1
          %s241 = smul.addr %s240, 32
          %s242 = scalar_lea.vmem [#allocation5], %s241
          %s243 = smul.u32 4, %s28
          %s245 = ssub.s32 512, 512
          %246 = vsyncadd %s239, %s245
          %s247 = smul.addr %s27, 4
          %s248 = sadd.s32 %s243, %s247
          %s249 = smul.addr %s248, 128
          %s250 = scalar_lea.hbm %s0, %s249
          %s251 = sshll.u32 %s242, 4
          %s252 = int_to_ptr.vmem [resolvable:$true] %s251
          %257 = dma.hbm_to_vmem [thread:$0]  %s250, 512, %s252, %s239, 128, 128, 8
        $region24: #{tpu_custom_call.1} parent=19 // pred_fallthru
          _
        // Predicated region
        $region25: #{tpu_custom_call.1} parent=19 // pred_check
          %p258 = pneg %p91
        $region26: #{tpu_custom_call.1} parent=19 // pred_check_branch
          %260 = sbr.rel (%p258) target = $region28
        $region27: #{tpu_custom_call.1} parent=19 // pred_region
          %s261 = sand.u32 %s20, 1
          %s262 = scalar_lea.sflag [#allocation9], %s261
          %s263 = sand.u32 %s81, 1
          %s264 = smul.addr %s263, 32
          %s265 = scalar_lea.vmem [#allocation8], %s264
          %s266 = smul.u32 4, %s28
          %s268 = ssub.s32 512, 512
          %269 = vsyncadd %s262, %s268
          %s270 = sadd.s32 %s29, %s266
          %s271 = smul.addr %s27, 4
          %s272 = sadd.s32 %s270, %s271
          %s273 = smul.addr %s272, 128
          %s274 = scalar_lea.hbm %s1, %s273
          %s275 = sshll.u32 %s265, 4
          %s276 = int_to_ptr.vmem [resolvable:$true] %s275
          %281 = dma.hbm_to_vmem [thread:$0]  %s274, 512, %s276, %s262, 128, 128, 8
        $region28: #{tpu_custom_call.1} parent=19 // pred_fallthru
          _
        // Predicated region
        $region29: #{tpu_custom_call.1} parent=19 // pred_check
          %p282 = pneg %p121
        $region30: #{tpu_custom_call.1} parent=19 // pred_check_branch
          %284 = sbr.rel (%p282) target = $region32
        $region31: #{tpu_custom_call.1} parent=19 // pred_region
          %s285 = sand.u32 %s20, 1
          %s286 = scalar_lea.sflag [#allocation9], %s285
          %s287 = sand.u32 %s111, 1
          %s288 = smul.addr %s287, 32
          %s289 = scalar_lea.vmem [#allocation10], %s288
          %s290 = smul.u32 4, %s28
          %s292 = ssub.s32 512, 512
          %293 = vsyncadd %s286, %s292
          %s294 = sadd.s32 %s29, %s290
          %s295 = smul.addr %s27, 4
          %s296 = sadd.s32 %s294, %s295
          %s297 = smul.addr %s296, 128
          %s298 = scalar_lea.hbm %s2, %s297
          %s299 = sshll.u32 %s289, 4
          %s300 = int_to_ptr.vmem [resolvable:$true] %s299
          %305 = dma.hbm_to_vmem [thread:$0]  %s298, 512, %s300, %s286, 128, 128, 8
        $region32: #{tpu_custom_call.1} parent=19 // pred_fallthru
          _
        // Predicated region
        $region33: #{tpu_custom_call.1} parent=19 // pred_check
          %p306 = pneg %p175
        $region34: #{tpu_custom_call.1} parent=19 // pred_check_branch
          %308 = sbr.rel (%p306) target = $region36
        $region35: #{tpu_custom_call.1} parent=19 // pred_region
          %p309 = scmp.lt.s32.totalorder %s27, 1
          %s310 = scalar_select %p309, %s27, 1
          %p311 = scmp.lt.s32.totalorder %s29, 0
          %s312 = scalar_select %p311, %s29, 0
          %s313 = sadd.s32 %s312, %s310
          %s314 = scalar_lea.vmem %s4, %s313
        $region36: #{tpu_custom_call.1} parent=19 // pred_fallthru
          _
      $region20: #{tpu_custom_call.1} parent=5 // pred_fallthru
        _
      %p315 = scmp.le.s32.totalorder 1, %s20
      %p316 = scmp.lt.s32.totalorder %s20, 3
      %p317 = pnand %p315, %p316
      %p318 = pneg %p317
      // Predicated region
      $region37: #{tpu_custom_call.1} parent=5 // pred_check
        _
      $region38: #{tpu_custom_call.1} parent=5 // pred_check_branch
        %320 = sbr.rel (%p317) target = $region40
      $region39: #{tpu_custom_call.1} parent=5 // pred_region
        %s321 = ssub.s32 %s20, 1
        %s322 = sand.u32 %s54, 1
        %s323 = scalar_lea.sflag [#allocation6], %s322
        %s324 = sand.u32 %s54, 1
        %s325 = smul.addr %s324, 32
        %s326 = scalar_lea.vmem [#allocation5], %s325
        // Predicated region
        $region41: #{tpu_custom_call.1} parent=39 // pred_check
          %p327 = pneg %p67
        $region42: #{tpu_custom_call.1} parent=39 // pred_check_branch
          %329 = sbr.rel (%p327) target = $region44
        $region43: #{tpu_custom_call.1} parent=39 // pred_region
          %330 = dma.done %s323, 512
        $region44: #{tpu_custom_call.1} parent=39 // pred_fallthru
          _
        %s331 = sand.u32 %s25, 1
        %s332 = scalar_lea.sflag [#allocation9], %s331
        %s333 = sand.u32 %s84, 1
        %s334 = smul.addr %s333, 32
        %s335 = scalar_lea.vmem [#allocation8], %s334
        // Predicated region
        $region45: #{tpu_custom_call.1} parent=39 // pred_check
          %p336 = pneg %p97
        $region46: #{tpu_custom_call.1} parent=39 // pred_check_branch
          %338 = sbr.rel (%p336) target = $region48
        $region47: #{tpu_custom_call.1} parent=39 // pred_region
          %339 = dma.done %s332, 512
        $region48: #{tpu_custom_call.1} parent=39 // pred_fallthru
          _
        %s340 = sand.u32 %s25, 1
        %s341 = scalar_lea.sflag [#allocation9], %s340
        %s342 = sand.u32 %s114, 1
        %s343 = smul.addr %s342, 32
        %s344 = scalar_lea.vmem [#allocation10], %s343
        // Predicated region
        $region49: #{tpu_custom_call.1} parent=39 // pred_check
          %p345 = pneg %p127
        $region50: #{tpu_custom_call.1} parent=39 // pred_check_branch
          %347 = sbr.rel (%p345) target = $region52
        $region51: #{tpu_custom_call.1} parent=39 // pred_region
          %348 = dma.done %s341, 512
        $region52: #{tpu_custom_call.1} parent=39 // pred_fallthru
          _
        %s349 = sand.u32 %s54, 1
        %s350 = scalar_lea.sflag [#allocation6], %s349
        %s351 = sand.u32 %s54, 1
        %s352 = smul.addr %s351, 32
        %s353 = scalar_lea.vmem [#allocation5], %s352
        %p354 = pneg %p67
        %p355 = pneg %p64
        %s356 = sand.u32 %s25, 1
        %s357 = scalar_lea.sflag [#allocation9], %s356
        %s358 = sand.u32 %s84, 1
        %s359 = smul.addr %s358, 32
        %s360 = scalar_lea.vmem [#allocation8], %s359
        %p361 = pneg %p97
        %p362 = pneg %p94
        %s363 = sand.u32 %s25, 1
        %s364 = scalar_lea.sflag [#allocation9], %s363
        %s365 = sand.u32 %s114, 1
        %s366 = smul.addr %s365, 32
        %s367 = scalar_lea.vmem [#allocation10], %s366
        %p368 = pneg %p127
        %p369 = pneg %p124
        %p370 = scmp.lt.s32.totalorder %s32, 0
        %s371 = scalar_select %p370, %s32, 0
        %s372 = smul.addr %s371, 8
        %s373 = scalar_lea.vmem %s3, %s372
        %p374 = pneg %p153
        %p375 = pneg %p150
        %p376 = scmp.lt.s32.totalorder %s30, 1
        %s377 = scalar_select %p376, %s30, 1
        %p378 = scmp.lt.s32.totalorder %s32, 0
        %s379 = scalar_select %p378, %s32, 0
        %s380 = sadd.s32 %s379, %s377
        %s381 = scalar_lea.vmem %s4, %s380
        %p382 = pneg %p181
        %p383 = pneg %p178
        %p384 = pneg %p209
        %p385 = pneg %p206
        %s386 = sand.u32 %s196, 1
        %s387 = scalar_lea.sflag [#allocation7], %s386
        %s388 = sand.u32 %s196, 1
        %s389 = smul.addr %s388, 8
        %s390 = scalar_lea.vmem [#allocation11], %s389
        %s391 = smul.u32 4, %s31
        %s392 = smul.u32 4, %s31
        %s393 = smul.u32 4, %s31
        %p394 = scmp.lt.s32.totalorder %s32, 0
        %s395 = scalar_select %p394, %s32, 0
        %s396 = smul.addr %s395, 8
        %s397 = scalar_lea.vmem %s3, %s396
        %p398 = scmp.lt.s32.totalorder %s30, 1
        %s399 = scalar_select %p398, %s30, 1
        %p400 = scmp.lt.s32.totalorder %s32, 0
        %s401 = scalar_select %p400, %s32, 0
        %s402 = sadd.s32 %s401, %s399
        %s403 = scalar_lea.vmem %s4, %s402
        %p404 = scmp.eq.s32.totalorder %s32, 0
        // Predicated region
        $region53: #{tpu_custom_call.1} parent=39 // pred_check
          %p405 = pneg %p404
        $region54: #{tpu_custom_call.1} parent=39 // pred_check_branch
          %407 = sbr.rel (%p405) target = $region56
        $region55: #{tpu_custom_call.1} parent=39 // pred_region
          %vm408 = vcmask 7168
          %409 = vst.msk [vmem:[#allocation2] sm:$0xff] %vm408, -1e+30
          %410 = vst.msk [vmem:[#allocation2 + $0x8] sm:$0xff] %vm408, -1e+30
          %411 = vst.msk [vmem:[#allocation2 + $0x10] sm:$0xff] %vm408, -1e+30
          %412 = vst.msk [vmem:[#allocation2 + $0x18] sm:$0xff] %vm408, -1e+30
          %413 = vst.msk [vmem:[#allocation3] sm:$0xff] %vm408, 0.0
          %414 = vst.msk [vmem:[#allocation3 + $0x8] sm:$0xff] %vm408, 0.0
          %415 = vst.msk [vmem:[#allocation3 + $0x10] sm:$0xff] %vm408, 0.0
          %416 = vst.msk [vmem:[#allocation3 + $0x18] sm:$0xff] %vm408, 0.0
          %vm417 = vcmask 261120
          %418 = vst.msk [vmem:[#allocation4] sm:$0xff] %vm417, 0.0
          %419 = vst.msk [vmem:[#allocation4 + $0x8] sm:$0xff] %vm417, 0.0
          %420 = vst.msk [vmem:[#allocation4 + $0x10] sm:$0xff] %vm417, 0.0
          %421 = vst.msk [vmem:[#allocation4 + $0x18] sm:$0xff] %vm417, 0.0
        $region56: #{tpu_custom_call.1} parent=39 // pred_fallthru
          _
        %v422 = vld [vmem:[%s326] sm:$0xff]
        %v423 = vld [vmem:[%s326 + $0x8] sm:$0xff]
        %v424 = vld [vmem:[%s326 + $0x10] sm:$0xff]
        %v425 = vld [vmem:[%s326 + $0x18] sm:$0xff]
        %v426 = vld [vmem:[%s335] sm:$0xff]
        %v427 = vld [vmem:[%s335 + $0x8] sm:$0xff]
        %v428 = vld [vmem:[%s335 + $0x10] sm:$0xff]
        %v429 = vld [vmem:[%s335 + $0x18] sm:$0xff]
        %v430 = vld [vmem:[%s344] sm:$0xff]
        %v431 = vld [vmem:[%s344 + $0x8] sm:$0xff]
        %v432 = vld [vmem:[%s344 + $0x10] sm:$0xff]
        %v433 = vld [vmem:[%s344 + $0x18] sm:$0xff]
        %v434 = vld [vmem:[%s397] sm:$0xff]
        %v435 = vld [vmem:[%s403] sm:$0x1]
        %vm436 = vcmask 261120
        %v438 = vsel %vm436, %v422, 0
        %v441 = vsel %vm436, %v426, 0
        %443 = vmatprep.subr.mxu0 0.0
        %444 = vmatpush1.xpose.msra.mxu0 %v441
        %445 = vmatprep.subr.mxu0 0.0
        %446 = vmatpush1.xpose.msra.mxu0 0.0
        %447 = vmatprep.subr.mxu0 0.0
        %448 = vmatpush1.xpose.msra.mxu0 0.0
        %449 = vmatprep.subr.mxu0 0.0
        %450 = vmatpush1.xpose.msra.mxu0 0.0
        %451 = vmatprep.subr.mxu0 0.0
        %452 = vmatpush1.xpose.msra.mxu0 0.0
        %453 = vmatprep.subr.mxu0 0.0
        %454 = vmatpush1.xpose.msra.mxu0 0.0
        %455 = vmatprep.subr.mxu0 0.0
        %456 = vmatpush1.xpose.msra.mxu0 0.0
        %457 = vmatprep.subr.mxu0 0.0
        %458 = vmatpush1.xpose.msra.mxu0 0.0
        %459 = vmatprep.subr.mxu0 0.0
        %460 = vmatpush1.xpose.msra.mxu0 0.0
        %461 = vmatprep.subr.mxu0 0.0
        %462 = vmatpush1.xpose.msra.mxu0 0.0
        %463 = vmatprep.subr.mxu0 0.0
        %464 = vmatpush1.xpose.msra.mxu0 0.0
        %465 = vmatprep.subr.mxu0 0.0
        %466 = vmatpush1.xpose.msra.mxu0 0.0
        %467 = vmatprep.subr.mxu0 0.0
        %468 = vmatpush1.xpose.msra.mxu0 0.0
        %469 = vmatprep.subr.mxu0 0.0
        %470 = vmatpush1.xpose.msra.mxu0 0.0
        %471 = vmatprep.subr.mxu0 0.0
        %472 = vmatpush1.xpose.msra.mxu0 0.0
        %473 = vmatprep.subr.mxu0 0.0
        %474 = vmatpush1.xpose.msra.mxu0 0.0
        %475 = vmatprep.subr.mxu0 0.0
        %476 = vmatpush1.xpose.msra.mxu0 0.0
        %477 = vmatprep.subr.mxu0 0.0
        %478 = vmatpush1.xpose.msra.mxu0 0.0
        %479 = vmatprep.subr.mxu0 0.0
        %480 = vmatpush1.xpose.msra.mxu0 0.0
        %481 = vmatprep.subr.mxu0 0.0
        %482 = vmatpush1.xpose.msra.mxu0 0.0
        %483 = vmatprep.subr.mxu0 0.0
        %484 = vmatpush1.xpose.msra.mxu0 0.0
        %485 = vmatprep.subr.mxu0 0.0
        %486 = vmatpush1.xpose.msra.mxu0 0.0
        %487 = vmatprep.subr.mxu0 0.0
        %488 = vmatpush1.xpose.msra.mxu0 0.0
        %489 = vmatprep.subr.mxu0 0.0
        %490 = vmatpush1.xpose.msra.mxu0 0.0
        %491 = vmatprep.subr.mxu0 0.0
        %492 = vmatpush1.xpose.msra.mxu0 0.0
        %493 = vmatprep.subr.mxu0 0.0
        %494 = vmatpush1.xpose.msra.mxu0 0.0
        %495 = vmatprep.subr.mxu0 0.0
        %496 = vmatpush1.xpose.msra.mxu0 0.0
        %497 = vmatprep.subr.mxu0 0.0
        %498 = vmatpush1.xpose.msra.mxu0 0.0
        %499 = vmatprep.subr.mxu0 0.0
        %500 = vmatpush1.xpose.msra.mxu0 0.0
        %501 = vmatprep.subr.mxu0 0.0
        %502 = vmatpush1.xpose.msra.mxu0 0.0
        %503 = vmatprep.subr.mxu0 0.0
        %504 = vmatpush1.xpose.msra.mxu0 0.0
        %505 = vmatprep.subr.mxu0 0.0
        %506 = vmatpush1.xpose.msra.mxu0 0.0
        %507 = vmatprep.mubr.f32.mxu0 0.0
        %508 = vmatmul.mubr.f32.gmra.mrb[0].mxu0 %v438
        %v509 = vpop.f32.mrb[0].mxu0
        %v510 = vadd.f32 %v434, %v509
        %v511 = vpop.f32.mrb[0].mxu0
        %512 = vdwg.mxu0
        %v514 = vsel %vm436, %v423, 0
        %v517 = vsel %vm436, %v427, 0
        %519 = vmatprep.subr.mxu0 0.0
        %520 = vmatpush1.xpose.msra.mxu0 %v517
        %521 = vmatprep.subr.mxu0 0.0
        %522 = vmatpush1.xpose.msra.mxu0 0.0
        %523 = vmatprep.subr.mxu0 0.0
        %524 = vmatpush1.xpose.msra.mxu0 0.0
        %525 = vmatprep.subr.mxu0 0.0
        %526 = vmatpush1.xpose.msra.mxu0 0.0
        %527 = vmatprep.subr.mxu0 0.0
        %528 = vmatpush1.xpose.msra.mxu0 0.0
        %529 = vmatprep.subr.mxu0 0.0
        %530 = vmatpush1.xpose.msra.mxu0 0.0
        %531 = vmatprep.subr.mxu0 0.0
        %532 = vmatpush1.xpose.msra.mxu0 0.0
        %533 = vmatprep.subr.mxu0 0.0
        %534 = vmatpush1.xpose.msra.mxu0 0.0
        %535 = vmatprep.subr.mxu0 0.0
        %536 = vmatpush1.xpose.msra.mxu0 0.0
        %537 = vmatprep.subr.mxu0 0.0
        %538 = vmatpush1.xpose.msra.mxu0 0.0
        %539 = vmatprep.subr.mxu0 0.0
        %540 = vmatpush1.xpose.msra.mxu0 0.0
        %541 = vmatprep.subr.mxu0 0.0
        %542 = vmatpush1.xpose.msra.mxu0 0.0
        %543 = vmatprep.subr.mxu0 0.0
        %544 = vmatpush1.xpose.msra.mxu0 0.0
        %545 = vmatprep.subr.mxu0 0.0
        %546 = vmatpush1.xpose.msra.mxu0 0.0
        %547 = vmatprep.subr.mxu0 0.0
        %548 = vmatpush1.xpose.msra.mxu0 0.0
        %549 = vmatprep.subr.mxu0 0.0
        %550 = vmatpush1.xpose.msra.mxu0 0.0
        %551 = vmatprep.subr.mxu0 0.0
        %552 = vmatpush1.xpose.msra.mxu0 0.0
        %553 = vmatprep.subr.mxu0 0.0
        %554 = vmatpush1.xpose.msra.mxu0 0.0
        %555 = vmatprep.subr.mxu0 0.0
        %556 = vmatpush1.xpose.msra.mxu0 0.0
        %557 = vmatprep.subr.mxu0 0.0
        %558 = vmatpush1.xpose.msra.mxu0 0.0
        %559 = vmatprep.subr.mxu0 0.0
        %560 = vmatpush1.xpose.msra.mxu0 0.0
        %561 = vmatprep.subr.mxu0 0.0
        %562 = vmatpush1.xpose.msra.mxu0 0.0
        %563 = vmatprep.subr.mxu0 0.0
        %564 = vmatpush1.xpose.msra.mxu0 0.0
        %565 = vmatprep.subr.mxu0 0.0
        %566 = vmatpush1.xpose.msra.mxu0 0.0
        %567 = vmatprep.subr.mxu0 0.0
        %568 = vmatpush1.xpose.msra.mxu0 0.0
        %569 = vmatprep.subr.mxu0 0.0
        %570 = vmatpush1.xpose.msra.mxu0 0.0
        %571 = vmatprep.subr.mxu0 0.0
        %572 = vmatpush1.xpose.msra.mxu0 0.0
        %573 = vmatprep.subr.mxu0 0.0
        %574 = vmatpush1.xpose.msra.mxu0 0.0
        %575 = vmatprep.subr.mxu0 0.0
        %576 = vmatpush1.xpose.msra.mxu0 0.0
        %577 = vmatprep.subr.mxu0 0.0
        %578 = vmatpush1.xpose.msra.mxu0 0.0
        %579 = vmatprep.subr.mxu0 0.0
        %580 = vmatpush1.xpose.msra.mxu0 0.0
        %581 = vmatprep.subr.mxu0 0.0
        %582 = vmatpush1.xpose.msra.mxu0 0.0
        %583 = vmatprep.mubr.f32.mxu0 0.0
        %584 = vmatmul.mubr.f32.gmra.mrb[0].mxu0 %v514
        %v585 = vpop.f32.mrb[0].mxu0
        %v586 = vadd.f32 %v434, %v585
        %v587 = vpop.f32.mrb[0].mxu0
        %588 = vdwg.mxu0
        %v590 = vsel %vm436, %v424, 0
        %v593 = vsel %vm436, %v428, 0
        %595 = vmatprep.subr.mxu0 0.0
        %596 = vmatpush1.xpose.msra.mxu0 %v593
        %597 = vmatprep.subr.mxu0 0.0
        %598 = vmatpush1.xpose.msra.mxu0 0.0
        %599 = vmatprep.subr.mxu0 0.0
        %600 = vmatpush1.xpose.msra.mxu0 0.0
        %601 = vmatprep.subr.mxu0 0.0
        %602 = vmatpush1.xpose.msra.mxu0 0.0
        %603 = vmatprep.subr.mxu0 0.0
        %604 = vmatpush1.xpose.msra.mxu0 0.0
        %605 = vmatprep.subr.mxu0 0.0
        %606 = vmatpush1.xpose.msra.mxu0 0.0
        %607 = vmatprep.subr.mxu0 0.0
        %608 = vmatpush1.xpose.msra.mxu0 0.0
        %609 = vmatprep.subr.mxu0 0.0
        %610 = vmatpush1.xpose.msra.mxu0 0.0
        %611 = vmatprep.subr.mxu0 0.0
        %612 = vmatpush1.xpose.msra.mxu0 0.0
        %613 = vmatprep.subr.mxu0 0.0
        %614 = vmatpush1.xpose.msra.mxu0 0.0
        %615 = vmatprep.subr.mxu0 0.0
        %616 = vmatpush1.xpose.msra.mxu0 0.0
        %617 = vmatprep.subr.mxu0 0.0
        %618 = vmatpush1.xpose.msra.mxu0 0.0
        %619 = vmatprep.subr.mxu0 0.0
        %620 = vmatpush1.xpose.msra.mxu0 0.0
        %621 = vmatprep.subr.mxu0 0.0
        %622 = vmatpush1.xpose.msra.mxu0 0.0
        %623 = vmatprep.subr.mxu0 0.0
        %624 = vmatpush1.xpose.msra.mxu0 0.0
        %625 = vmatprep.subr.mxu0 0.0
        %626 = vmatpush1.xpose.msra.mxu0 0.0
        %627 = vmatprep.subr.mxu0 0.0
        %628 = vmatpush1.xpose.msra.mxu0 0.0
        %629 = vmatprep.subr.mxu0 0.0
        %630 = vmatpush1.xpose.msra.mxu0 0.0
        %631 = vmatprep.subr.mxu0 0.0
        %632 = vmatpush1.xpose.msra.mxu0 0.0
        %633 = vmatprep.subr.mxu0 0.0
        %634 = vmatpush1.xpose.msra.mxu0 0.0
        %635 = vmatprep.subr.mxu0 0.0
        %636 = vmatpush1.xpose.msra.mxu0 0.0
        %637 = vmatprep.subr.mxu0 0.0
        %638 = vmatpush1.xpose.msra.mxu0 0.0
        %639 = vmatprep.subr.mxu0 0.0
        %640 = vmatpush1.xpose.msra.mxu0 0.0
        %641 = vmatprep.subr.mxu0 0.0
        %642 = vmatpush1.xpose.msra.mxu0 0.0
        %643 = vmatprep.subr.mxu0 0.0
        %644 = vmatpush1.xpose.msra.mxu0 0.0
        %645 = vmatprep.subr.mxu0 0.0
        %646 = vmatpush1.xpose.msra.mxu0 0.0
        %647 = vmatprep.subr.mxu0 0.0
        %648 = vmatpush1.xpose.msra.mxu0 0.0
        %649 = vmatprep.subr.mxu0 0.0
        %650 = vmatpush1.xpose.msra.mxu0 0.0
        %651 = vmatprep.subr.mxu0 0.0
        %652 = vmatpush1.xpose.msra.mxu0 0.0
        %653 = vmatprep.subr.mxu0 0.0
        %654 = vmatpush1.xpose.msra.mxu0 0.0
        %655 = vmatprep.subr.mxu0 0.0
        %656 = vmatpush1.xpose.msra.mxu0 0.0
        %657 = vmatprep.subr.mxu0 0.0
        %658 = vmatpush1.xpose.msra.mxu0 0.0
        %659 = vmatprep.mubr.f32.mxu0 0.0
        %660 = vmatmul.mubr.f32.gmra.mrb[0].mxu0 %v590
        %v661 = vpop.f32.mrb[0].mxu0
        %v662 = vadd.f32 %v434, %v661
        %v663 = vpop.f32.mrb[0].mxu0
        %664 = vdwg.mxu0
        %v666 = vsel %vm436, %v425, 0
        %v669 = vsel %vm436, %v429, 0
        %671 = vmatprep.subr.mxu0 0.0
        %672 = vmatpush1.xpose.msra.mxu0 %v669
        %673 = vmatprep.subr.mxu0 0.0
        %674 = vmatpush1.xpose.msra.mxu0 0.0
        %675 = vmatprep.subr.mxu0 0.0
        %676 = vmatpush1.xpose.msra.mxu0 0.0
        %677 = vmatprep.subr.mxu0 0.0
        %678 = vmatpush1.xpose.msra.mxu0 0.0
        %679 = vmatprep.subr.mxu0 0.0
        %680 = vmatpush1.xpose.msra.mxu0 0.0
        %681 = vmatprep.subr.mxu0 0.0
        %682 = vmatpush1.xpose.msra.mxu0 0.0
        %683 = vmatprep.subr.mxu0 0.0
        %684 = vmatpush1.xpose.msra.mxu0 0.0
        %685 = vmatprep.subr.mxu0 0.0
        %686 = vmatpush1.xpose.msra.mxu0 0.0
        %687 = vmatprep.subr.mxu0 0.0
        %688 = vmatpush1.xpose.msra.mxu0 0.0
        %689 = vmatprep.subr.mxu0 0.0
        %690 = vmatpush1.xpose.msra.mxu0 0.0
        %691 = vmatprep.subr.mxu0 0.0
        %692 = vmatpush1.xpose.msra.mxu0 0.0
        %693 = vmatprep.subr.mxu0 0.0
        %694 = vmatpush1.xpose.msra.mxu0 0.0
        %695 = vmatprep.subr.mxu0 0.0
        %696 = vmatpush1.xpose.msra.mxu0 0.0
        %697 = vmatprep.subr.mxu0 0.0
        %698 = vmatpush1.xpose.msra.mxu0 0.0
        %699 = vmatprep.subr.mxu0 0.0
        %700 = vmatpush1.xpose.msra.mxu0 0.0
        %701 = vmatprep.subr.mxu0 0.0
        %702 = vmatpush1.xpose.msra.mxu0 0.0
        %703 = vmatprep.subr.mxu0 0.0
        %704 = vmatpush1.xpose.msra.mxu0 0.0
        %705 = vmatprep.subr.mxu0 0.0
        %706 = vmatpush1.xpose.msra.mxu0 0.0
        %707 = vmatprep.subr.mxu0 0.0
        %708 = vmatpush1.xpose.msra.mxu0 0.0
        %709 = vmatprep.subr.mxu0 0.0
        %710 = vmatpush1.xpose.msra.mxu0 0.0
        %711 = vmatprep.subr.mxu0 0.0
        %712 = vmatpush1.xpose.msra.mxu0 0.0
        %713 = vmatprep.subr.mxu0 0.0
        %714 = vmatpush1.xpose.msra.mxu0 0.0
        %715 = vmatprep.subr.mxu0 0.0
        %716 = vmatpush1.xpose.msra.mxu0 0.0
        %717 = vmatprep.subr.mxu0 0.0
        %718 = vmatpush1.xpose.msra.mxu0 0.0
        %719 = vmatprep.subr.mxu0 0.0
        %720 = vmatpush1.xpose.msra.mxu0 0.0
        %721 = vmatprep.subr.mxu0 0.0
        %722 = vmatpush1.xpose.msra.mxu0 0.0
        %723 = vmatprep.subr.mxu0 0.0
        %724 = vmatpush1.xpose.msra.mxu0 0.0
        %725 = vmatprep.subr.mxu0 0.0
        %726 = vmatpush1.xpose.msra.mxu0 0.0
        %727 = vmatprep.subr.mxu0 0.0
        %728 = vmatpush1.xpose.msra.mxu0 0.0
        %729 = vmatprep.subr.mxu0 0.0
        %730 = vmatpush1.xpose.msra.mxu0 0.0
        %731 = vmatprep.subr.mxu0 0.0
        %732 = vmatpush1.xpose.msra.mxu0 0.0
        %733 = vmatprep.subr.mxu0 0.0
        %734 = vmatpush1.xpose.msra.mxu0 0.0
        %735 = vmatprep.mubr.f32.mxu0 0.0
        %736 = vmatmul.mubr.f32.gmra.mrb[0].mxu0 %v666
        %v737 = vpop.f32.mrb[0].mxu0
        %v738 = vadd.f32 %v434, %v737
        %v739 = vpop.f32.mrb[0].mxu0
        %740 = vdwg.mxu0
        %v742 = vlaneseq
        %v743 = vshrl.u32 %v742, 7
        %v744 = vsub.s32 0, %v743
        %v745 = vrot.slane %v435, %v744
        %v747 = vadd.f32 %v510, %v745
        %v748 = vadd.f32 %v586, %v745
        %v749 = vadd.f32 %v662, %v745
        %v750 = vadd.f32 %v738, %v745
        %v751 = vmul.f32 %v747, 0.17677669
        %v752 = vmul.f32 %v748, 0.17677669
        %v753 = vmul.f32 %v749, 0.17677669
        %v754 = vmul.f32 %v750, 0.17677669
        %v755 = vld [vmem:[#allocation2] sm:$0xff]
        %v756 = vld [vmem:[#allocation2 + $0x8] sm:$0xff]
        %v757 = vld [vmem:[#allocation2 + $0x10] sm:$0xff]
        %v758 = vld [vmem:[#allocation2 + $0x18] sm:$0xff]
        %vm759 = vcmask 64512
        %v760 = vsel %vm759, %v751, -inf
        %761 = vmax.xlane.f32.xlu0 %v760
        %v762 = vpop.xlane.xlu0 %761
        %v763 = vsel %vm759, %v752, -inf
        %764 = vmax.xlane.f32.xlu0 %v763
        %v765 = vpop.xlane.xlu0 %764
        %v766 = vsel %vm759, %v753, -inf
        %767 = vmax.xlane.f32.xlu0 %v766
        %v768 = vpop.xlane.xlu0 %767
        %v769 = vsel %vm759, %v754, -inf
        %770 = vmax.xlane.f32.xlu0 %v769
        %v771 = vpop.xlane.xlu0 %770
        %v772 = vmax.f32 %v755, %v762
        %v773 = vmax.f32 %v756, %v765
        %v774 = vmax.f32 %v757, %v768
        %v775 = vmax.f32 %v758, %v771
        %v776 = vsub.f32 %v755, %v772
        %v777 = vsub.f32 %v756, %v773
        %v778 = vsub.f32 %v757, %v774
        %v779 = vsub.f32 %v758, %v775
        %v780 = vmul.f32 %v776, 1.442695
        %v781 = vpow.pop %v780
        %v782 = vmul.f32 %v777, 1.442695
        %v783 = vpow.pop %v782
        %v784 = vmul.f32 %v778, 1.442695
        %v785 = vpow.pop %v784
        %v786 = vmul.f32 %v779, 1.442695
        %v787 = vpow.pop %v786
        %789 = vset.pattern.permute.xlu0 0
        %790 = vperm.xlu0 %789, %v772
        %v791 = vpop.permute.xlu0 %790
        %794 = vset.pattern.permute.xlu0 0
        %795 = vperm.xlu0 %794, %v773
        %v796 = vpop.permute.xlu0 %795
        %799 = vset.pattern.permute.xlu0 0
        %800 = vperm.xlu0 %799, %v774
        %v801 = vpop.permute.xlu0 %800
        %804 = vset.pattern.permute.xlu0 0
        %805 = vperm.xlu0 %804, %v775
        %v806 = vpop.permute.xlu0 %805
        %v808 = vsub.f32 %v751, %v791
        %v809 = vsub.f32 %v752, %v796
        %v810 = vsub.f32 %v753, %v801
        %v811 = vsub.f32 %v754, %v806
        %v812 = vmul.f32 %v808, 1.442695
        %v813 = vpow.pop %v812
        %v814 = vmul.f32 %v809, 1.442695
        %v815 = vpow.pop %v814
        %v816 = vmul.f32 %v810, 1.442695
        %v817 = vpow.pop %v816
        %v818 = vmul.f32 %v811, 1.442695
        %v819 = vpow.pop %v818
        %v820 = vld [vmem:[#allocation3] sm:$0xff]
        %v821 = vld [vmem:[#allocation3 + $0x8] sm:$0xff]
        %v822 = vld [vmem:[#allocation3 + $0x10] sm:$0xff]
        %v823 = vld [vmem:[#allocation3 + $0x18] sm:$0xff]
        %v824 = vmul.f32 %v781, %v820
        %v825 = vmul.f32 %v783, %v821
        %v826 = vmul.f32 %v785, %v822
        %v827 = vmul.f32 %v787, %v823
        %v828 = vsel %vm759, %v813, 0.0
        %829 = vadd.xlane.f32.xlu0 %v828
        %v830 = vpop.xlane.xlu0 %829
        %v831 = vsel %vm759, %v815, 0.0
        %832 = vadd.xlane.f32.xlu0 %v831
        %v833 = vpop.xlane.xlu0 %832
        %v834 = vsel %vm759, %v817, 0.0
        %835 = vadd.xlane.f32.xlu0 %v834
        %v836 = vpop.xlane.xlu0 %835
        %v837 = vsel %vm759, %v819, 0.0
        %838 = vadd.xlane.f32.xlu0 %v837
        %v839 = vpop.xlane.xlu0 %838
        %v840 = vadd.f32 %v824, %v830
        %v841 = vadd.f32 %v825, %v833
        %v842 = vadd.f32 %v826, %v836
        %v843 = vadd.f32 %v827, %v839
        %vm844 = vcmask 7168
        %845 = vst.msk [vmem:[#allocation3] sm:$0xff] %vm844, %v840
        %846 = vst.msk [vmem:[#allocation3 + $0x8] sm:$0xff] %vm844, %v841
        %847 = vst.msk [vmem:[#allocation3 + $0x10] sm:$0xff] %vm844, %v842
        %848 = vst.msk [vmem:[#allocation3 + $0x18] sm:$0xff] %vm844, %v843
        %v849 = vld [vmem:[#allocation4] sm:$0xff]
        %v850 = vld [vmem:[#allocation4 + $0x8] sm:$0xff]
        %v851 = vld [vmem:[#allocation4 + $0x10] sm:$0xff]
        %v852 = vld [vmem:[#allocation4 + $0x18] sm:$0xff]
        %854 = vset.pattern.permute.xlu0 0
        %855 = vperm.xlu0 %854, %v781
        %v856 = vpop.permute.xlu0 %855
        %859 = vset.pattern.permute.xlu0 0
        %860 = vperm.xlu0 %859, %v783
        %v861 = vpop.permute.xlu0 %860
        %864 = vset.pattern.permute.xlu0 0
        %865 = vperm.xlu0 %864, %v785
        %v866 = vpop.permute.xlu0 %865
        %869 = vset.pattern.permute.xlu0 0
        %870 = vperm.xlu0 %869, %v787
        %v871 = vpop.permute.xlu0 %870
        %v873 = vmul.f32 %v856, %v849
        %v874 = vmul.f32 %v861, %v850
        %v875 = vmul.f32 %v866, %v851
        %v876 = vmul.f32 %v871, %v852
        %v878 = vsel %vm759, %v813, 0
        %880 = vmatprep.subr.mxu0 0.0
        %881 = vmatpush1.msra.mxu0 %v430
        %882 = vmatprep.subr.mxu0 0.0
        %883 = vmatpush1.msra.mxu0 0.0
        %884 = vmatprep.subr.mxu0 0.0
        %885 = vmatpush1.msra.mxu0 0.0
        %886 = vmatprep.subr.mxu0 0.0
        %887 = vmatpush1.msra.mxu0 0.0
        %888 = vmatprep.subr.mxu0 0.0
        %889 = vmatpush1.msra.mxu0 0.0
        %890 = vmatprep.subr.mxu0 0.0
        %891 = vmatpush1.msra.mxu0 0.0
        %892 = vmatprep.subr.mxu0 0.0
        %893 = vmatpush1.msra.mxu0 0.0
        %894 = vmatprep.subr.mxu0 0.0
        %895 = vmatpush1.msra.mxu0 0.0
        %896 = vmatprep.subr.mxu0 0.0
        %897 = vmatpush1.msra.mxu0 0.0
        %898 = vmatprep.subr.mxu0 0.0
        %899 = vmatpush1.msra.mxu0 0.0
        %900 = vmatprep.subr.mxu0 0.0
        %901 = vmatpush1.msra.mxu0 0.0
        %902 = vmatprep.subr.mxu0 0.0
        %903 = vmatpush1.msra.mxu0 0.0
        %904 = vmatprep.subr.mxu0 0.0
        %905 = vmatpush1.msra.mxu0 0.0
        %906 = vmatprep.subr.mxu0 0.0
        %907 = vmatpush1.msra.mxu0 0.0
        %908 = vmatprep.subr.mxu0 0.0
        %909 = vmatpush1.msra.mxu0 0.0
        %910 = vmatprep.subr.mxu0 0.0
        %911 = vmatpush1.msra.mxu0 0.0
        %912 = vmatprep.subr.mxu0 0.0
        %913 = vmatpush1.msra.mxu0 0.0
        %914 = vmatprep.subr.mxu0 0.0
        %915 = vmatpush1.msra.mxu0 0.0
        %916 = vmatprep.subr.mxu0 0.0
        %917 = vmatpush1.msra.mxu0 0.0
        %918 = vmatprep.subr.mxu0 0.0
        %919 = vmatpush1.msra.mxu0 0.0
        %920 = vmatprep.subr.mxu0 0.0
        %921 = vmatpush1.msra.mxu0 0.0
        %922 = vmatprep.subr.mxu0 0.0
        %923 = vmatpush1.msra.mxu0 0.0
        %924 = vmatprep.subr.mxu0 0.0
        %925 = vmatpush1.msra.mxu0 0.0
        %926 = vmatprep.subr.mxu0 0.0
        %927 = vmatpush1.msra.mxu0 0.0
        %928 = vmatprep.subr.mxu0 0.0
        %929 = vmatpush1.msra.mxu0 0.0
        %930 = vmatprep.subr.mxu0 0.0
        %931 = vmatpush1.msra.mxu0 0.0
        %932 = vmatprep.subr.mxu0 0.0
        %933 = vmatpush1.msra.mxu0 0.0
        %934 = vmatprep.subr.mxu0 0.0
        %935 = vmatpush1.msra.mxu0 0.0
        %936 = vmatprep.subr.mxu0 0.0
        %937 = vmatpush1.msra.mxu0 0.0
        %938 = vmatprep.subr.mxu0 0.0
        %939 = vmatpush1.msra.mxu0 0.0
        %940 = vmatprep.subr.mxu0 0.0
        %941 = vmatpush1.msra.mxu0 0.0
        %942 = vmatprep.subr.mxu0 0.0
        %943 = vmatpush1.msra.mxu0 0.0
        %944 = vmatprep.mubr.f32.mxu0 0.0
        %945 = vmatmul.mubr.f32.gmra.mrb[0].mxu0 %v878
        %v946 = vpop.f32.mrb[0].mxu0
        %v947 = vadd.f32 0.0, %v946
        %v948 = vpop.f32.mrb[0].mxu0
        %949 = vdwg.mxu0
        %v951 = vsel %vm759, %v815, 0
        %953 = vmatprep.subr.mxu0 0.0
        %954 = vmatpush1.msra.mxu0 %v431
        %955 = vmatprep.subr.mxu0 0.0
        %956 = vmatpush1.msra.mxu0 0.0
        %957 = vmatprep.subr.mxu0 0.0
        %958 = vmatpush1.msra.mxu0 0.0
        %959 = vmatprep.subr.mxu0 0.0
        %960 = vmatpush1.msra.mxu0 0.0
        %961 = vmatprep.subr.mxu0 0.0
        %962 = vmatpush1.msra.mxu0 0.0
        %963 = vmatprep.subr.mxu0 0.0
        %964 = vmatpush1.msra.mxu0 0.0
        %965 = vmatprep.subr.mxu0 0.0
        %966 = vmatpush1.msra.mxu0 0.0
        %967 = vmatprep.subr.mxu0 0.0
        %968 = vmatpush1.msra.mxu0 0.0
        %969 = vmatprep.subr.mxu0 0.0
        %970 = vmatpush1.msra.mxu0 0.0
        %971 = vmatprep.subr.mxu0 0.0
        %972 = vmatpush1.msra.mxu0 0.0
        %973 = vmatprep.subr.mxu0 0.0
        %974 = vmatpush1.msra.mxu0 0.0
        %975 = vmatprep.subr.mxu0 0.0
        %976 = vmatpush1.msra.mxu0 0.0
        %977 = vmatprep.subr.mxu0 0.0
        %978 = vmatpush1.msra.mxu0 0.0
        %979 = vmatprep.subr.mxu0 0.0
        %980 = vmatpush1.msra.mxu0 0.0
        %981 = vmatprep.subr.mxu0 0.0
        %982 = vmatpush1.msra.mxu0 0.0
        %983 = vmatprep.subr.mxu0 0.0
        %984 = vmatpush1.msra.mxu0 0.0
        %985 = vmatprep.subr.mxu0 0.0
        %986 = vmatpush1.msra.mxu0 0.0
        %987 = vmatprep.subr.mxu0 0.0
        %988 = vmatpush1.msra.mxu0 0.0
        %989 = vmatprep.subr.mxu0 0.0
        %990 = vmatpush1.msra.mxu0 0.0
        %991 = vmatprep.subr.mxu0 0.0
        %992 = vmatpush1.msra.mxu0 0.0
        %993 = vmatprep.subr.mxu0 0.0
        %994 = vmatpush1.msra.mxu0 0.0
        %995 = vmatprep.subr.mxu0 0.0
        %996 = vmatpush1.msra.mxu0 0.0
        %997 = vmatprep.subr.mxu0 0.0
        %998 = vmatpush1.msra.mxu0 0.0
        %999 = vmatprep.subr.mxu0 0.0
        %1000 = vmatpush1.msra.mxu0 0.0
        %1001 = vmatprep.subr.mxu0 0.0
        %1002 = vmatpush1.msra.mxu0 0.0
        %1003 = vmatprep.subr.mxu0 0.0
        %1004 = vmatpush1.msra.mxu0 0.0
        %1005 = vmatprep.subr.mxu0 0.0
        %1006 = vmatpush1.msra.mxu0 0.0
        %1007 = vmatprep.subr.mxu0 0.0
        %1008 = vmatpush1.msra.mxu0 0.0
        %1009 = vmatprep.subr.mxu0 0.0
        %1010 = vmatpush1.msra.mxu0 0.0
        %1011 = vmatprep.subr.mxu0 0.0
        %1012 = vmatpush1.msra.mxu0 0.0
        %1013 = vmatprep.subr.mxu0 0.0
        %1014 = vmatpush1.msra.mxu0 0.0
        %1015 = vmatprep.subr.mxu0 0.0
        %1016 = vmatpush1.msra.mxu0 0.0
        %1017 = vmatprep.mubr.f32.mxu0 0.0
        %1018 = vmatmul.mubr.f32.gmra.mrb[0].mxu0 %v951
        %v1019 = vpop.f32.mrb[0].mxu0
        %v1020 = vadd.f32 0.0, %v1019
        %v1021 = vpop.f32.mrb[0].mxu0
        %1022 = vdwg.mxu0
        %v1024 = vsel %vm759, %v817, 0
        %1026 = vmatprep.subr.mxu0 0.0
        %1027 = vmatpush1.msra.mxu0 %v432
        %1028 = vmatprep.subr.mxu0 0.0
        %1029 = vmatpush1.msra.mxu0 0.0
        %1030 = vmatprep.subr.mxu0 0.0
        %1031 = vmatpush1.msra.mxu0 0.0
        %1032 = vmatprep.subr.mxu0 0.0
        %1033 = vmatpush1.msra.mxu0 0.0
        %1034 = vmatprep.subr.mxu0 0.0
        %1035 = vmatpush1.msra.mxu0 0.0
        %1036 = vmatprep.subr.mxu0 0.0
        %1037 = vmatpush1.msra.mxu0 0.0
        %1038 = vmatprep.subr.mxu0 0.0
        %1039 = vmatpush1.msra.mxu0 0.0
        %1040 = vmatprep.subr.mxu0 0.0
        %1041 = vmatpush1.msra.mxu0 0.0
        %1042 = vmatprep.subr.mxu0 0.0
        %1043 = vmatpush1.msra.mxu0 0.0
        %1044 = vmatprep.subr.mxu0 0.0
        %1045 = vmatpush1.msra.mxu0 0.0
        %1046 = vmatprep.subr.mxu0 0.0
        %1047 = vmatpush1.msra.mxu0 0.0
        %1048 = vmatprep.subr.mxu0 0.0
        %1049 = vmatpush1.msra.mxu0 0.0
        %1050 = vmatprep.subr.mxu0 0.0
        %1051 = vmatpush1.msra.mxu0 0.0
        %1052 = vmatprep.subr.mxu0 0.0
        %1053 = vmatpush1.msra.mxu0 0.0
        %1054 = vmatprep.subr.mxu0 0.0
        %1055 = vmatpush1.msra.mxu0 0.0
        %1056 = vmatprep.subr.mxu0 0.0
        %1057 = vmatpush1.msra.mxu0 0.0
        %1058 = vmatprep.subr.mxu0 0.0
        %1059 = vmatpush1.msra.mxu0 0.0
        %1060 = vmatprep.subr.mxu0 0.0
        %1061 = vmatpush1.msra.mxu0 0.0
        %1062 = vmatprep.subr.mxu0 0.0
        %1063 = vmatpush1.msra.mxu0 0.0
        %1064 = vmatprep.subr.mxu0 0.0
        %1065 = vmatpush1.msra.mxu0 0.0
        %1066 = vmatprep.subr.mxu0 0.0
        %1067 = vmatpush1.msra.mxu0 0.0
        %1068 = vmatprep.subr.mxu0 0.0
        %1069 = vmatpush1.msra.mxu0 0.0
        %1070 = vmatprep.subr.mxu0 0.0
        %1071 = vmatpush1.msra.mxu0 0.0
        %1072 = vmatprep.subr.mxu0 0.0
        %1073 = vmatpush1.msra.mxu0 0.0
        %1074 = vmatprep.subr.mxu0 0.0
        %1075 = vmatpush1.msra.mxu0 0.0
        %1076 = vmatprep.subr.mxu0 0.0
        %1077 = vmatpush1.msra.mxu0 0.0
        %1078 = vmatprep.subr.mxu0 0.0
        %1079 = vmatpush1.msra.mxu0 0.0
        %1080 = vmatprep.subr.mxu0 0.0
        %1081 = vmatpush1.msra.mxu0 0.0
        %1082 = vmatprep.subr.mxu0 0.0
        %1083 = vmatpush1.msra.mxu0 0.0
        %1084 = vmatprep.subr.mxu0 0.0
        %1085 = vmatpush1.msra.mxu0 0.0
        %1086 = vmatprep.subr.mxu0 0.0
        %1087 = vmatpush1.msra.mxu0 0.0
        %1088 = vmatprep.subr.mxu0 0.0
        %1089 = vmatpush1.msra.mxu0 0.0
        %1090 = vmatprep.mubr.f32.mxu0 0.0
        %1091 = vmatmul.mubr.f32.gmra.mrb[0].mxu0 %v1024
        %v1092 = vpop.f32.mrb[0].mxu0
        %v1093 = vadd.f32 0.0, %v1092
        %v1094 = vpop.f32.mrb[0].mxu0
        %1095 = vdwg.mxu0
        %v1097 = vsel %vm759, %v819, 0
        %1099 = vmatprep.subr.mxu0 0.0
        %1100 = vmatpush1.msra.mxu0 %v433
        %1101 = vmatprep.subr.mxu0 0.0
        %1102 = vmatpush1.msra.mxu0 0.0
        %1103 = vmatprep.subr.mxu0 0.0
        %1104 = vmatpush1.msra.mxu0 0.0
        %1105 = vmatprep.subr.mxu0 0.0
        %1106 = vmatpush1.msra.mxu0 0.0
        %1107 = vmatprep.subr.mxu0 0.0
        %1108 = vmatpush1.msra.mxu0 0.0
        %1109 = vmatprep.subr.mxu0 0.0
        %1110 = vmatpush1.msra.mxu0 0.0
        %1111 = vmatprep.subr.mxu0 0.0
        %1112 = vmatpush1.msra.mxu0 0.0
        %1113 = vmatprep.subr.mxu0 0.0
        %1114 = vmatpush1.msra.mxu0 0.0
        %1115 = vmatprep.subr.mxu0 0.0
        %1116 = vmatpush1.msra.mxu0 0.0
        %1117 = vmatprep.subr.mxu0 0.0
        %1118 = vmatpush1.msra.mxu0 0.0
        %1119 = vmatprep.subr.mxu0 0.0
        %1120 = vmatpush1.msra.mxu0 0.0
        %1121 = vmatprep.subr.mxu0 0.0
        %1122 = vmatpush1.msra.mxu0 0.0
        %1123 = vmatprep.subr.mxu0 0.0
        %1124 = vmatpush1.msra.mxu0 0.0
        %1125 = vmatprep.subr.mxu0 0.0
        %1126 = vmatpush1.msra.mxu0 0.0
        %1127 = vmatprep.subr.mxu0 0.0
        %1128 = vmatpush1.msra.mxu0 0.0
        %1129 = vmatprep.subr.mxu0 0.0
        %1130 = vmatpush1.msra.mxu0 0.0
        %1131 = vmatprep.subr.mxu0 0.0
        %1132 = vmatpush1.msra.mxu0 0.0
        %1133 = vmatprep.subr.mxu0 0.0
        %1134 = vmatpush1.msra.mxu0 0.0
        %1135 = vmatprep.subr.mxu0 0.0
        %1136 = vmatpush1.msra.mxu0 0.0
        %1137 = vmatprep.subr.mxu0 0.0
        %1138 = vmatpush1.msra.mxu0 0.0
        %1139 = vmatprep.subr.mxu0 0.0
        %1140 = vmatpush1.msra.mxu0 0.0
        %1141 = vmatprep.subr.mxu0 0.0
        %1142 = vmatpush1.msra.mxu0 0.0
        %1143 = vmatprep.subr.mxu0 0.0
        %1144 = vmatpush1.msra.mxu0 0.0
        %1145 = vmatprep.subr.mxu0 0.0
        %1146 = vmatpush1.msra.mxu0 0.0
        %1147 = vmatprep.subr.mxu0 0.0
        %1148 = vmatpush1.msra.mxu0 0.0
        %1149 = vmatprep.subr.mxu0 0.0
        %1150 = vmatpush1.msra.mxu0 0.0
        %1151 = vmatprep.subr.mxu0 0.0
        %1152 = vmatpush1.msra.mxu0 0.0
        %1153 = vmatprep.subr.mxu0 0.0
        %1154 = vmatpush1.msra.mxu0 0.0
        %1155 = vmatprep.subr.mxu0 0.0
        %1156 = vmatpush1.msra.mxu0 0.0
        %1157 = vmatprep.subr.mxu0 0.0
        %1158 = vmatpush1.msra.mxu0 0.0
        %1159 = vmatprep.subr.mxu0 0.0
        %1160 = vmatpush1.msra.mxu0 0.0
        %1161 = vmatprep.subr.mxu0 0.0
        %1162 = vmatpush1.msra.mxu0 0.0
        %1163 = vmatprep.mubr.f32.mxu0 0.0
        %1164 = vmatmul.mubr.f32.gmra.mrb[0].mxu0 %v1097
        %v1165 = vpop.f32.mrb[0].mxu0
        %v1166 = vadd.f32 0.0, %v1165
        %v1167 = vpop.f32.mrb[0].mxu0
        %1168 = vdwg.mxu0
        %v1169 = vadd.f32 %v873, %v947
        %v1170 = vadd.f32 %v874, %v1020
        %v1171 = vadd.f32 %v875, %v1093
        %v1172 = vadd.f32 %v876, %v1166
        %1173 = vst.msk [vmem:[#allocation4] sm:$0xff] %vm436, %v1169
        %1174 = vst.msk [vmem:[#allocation4 + $0x8] sm:$0xff] %vm436, %v1170
        %1175 = vst.msk [vmem:[#allocation4 + $0x10] sm:$0xff] %vm436, %v1171
        %1176 = vst.msk [vmem:[#allocation4 + $0x18] sm:$0xff] %vm436, %v1172
        %1177 = vst.msk [vmem:[#allocation2] sm:$0xff] %vm844, %v772
        %1178 = vst.msk [vmem:[#allocation2 + $0x8] sm:$0xff] %vm844, %v773
        %1179 = vst.msk [vmem:[#allocation2 + $0x10] sm:$0xff] %vm844, %v774
        %1180 = vst.msk [vmem:[#allocation2 + $0x18] sm:$0xff] %vm844, %v775
        // Predicated region
        $region57: #{tpu_custom_call.1} parent=39 // pred_check
          %p1181 = pneg %p404
        $region58: #{tpu_custom_call.1} parent=39 // pred_check_branch
          %1183 = sbr.rel (%p1181) target = $region60
        $region59: #{tpu_custom_call.1} parent=39 // pred_region
          %v1184 = vld [vmem:[#allocation3] sm:$0xff]
          %v1185 = vld [vmem:[#allocation3 + $0x8] sm:$0xff]
          %v1186 = vld [vmem:[#allocation3 + $0x10] sm:$0xff]
          %v1187 = vld [vmem:[#allocation3 + $0x18] sm:$0xff]
          %v1188 = vrcp.pop %v1184
          %v1189 = vrcp.pop %v1185
          %v1190 = vrcp.pop %v1186
          %v1191 = vrcp.pop %v1187
          %v1192 = vmul.f32 %v1184, %v1188
          %v1193 = vmul.f32 %v1185, %v1189
          %v1194 = vmul.f32 %v1186, %v1190
          %v1195 = vmul.f32 %v1187, %v1191
          %v1196 = vsub.f32 2.0, %v1192
          %v1197 = vsub.f32 2.0, %v1193
          %v1198 = vsub.f32 2.0, %v1194
          %v1199 = vsub.f32 2.0, %v1195
          %v1200 = vmul.f32 %v1188, %v1196
          %v1201 = vmul.f32 %v1189, %v1197
          %v1202 = vmul.f32 %v1190, %v1198
          %v1203 = vmul.f32 %v1191, %v1199
          %v1204 = vld [vmem:[#allocation4] sm:$0xff]
          %v1205 = vld [vmem:[#allocation4 + $0x8] sm:$0xff]
          %v1206 = vld [vmem:[#allocation4 + $0x10] sm:$0xff]
          %v1207 = vld [vmem:[#allocation4 + $0x18] sm:$0xff]
          %1209 = vset.pattern.permute.xlu0 0
          %1210 = vperm.xlu0 %1209, %v1200
          %v1211 = vpop.permute.xlu0 %1210
          %1214 = vset.pattern.permute.xlu0 0
          %1215 = vperm.xlu0 %1214, %v1201
          %v1216 = vpop.permute.xlu0 %1215
          %1219 = vset.pattern.permute.xlu0 0
          %1220 = vperm.xlu0 %1219, %v1202
          %v1221 = vpop.permute.xlu0 %1220
          %1224 = vset.pattern.permute.xlu0 0
          %1225 = vperm.xlu0 %1224, %v1203
          %v1226 = vpop.permute.xlu0 %1225
          %v1228 = vmul.f32 %v1204, %v1211
          %v1229 = vmul.f32 %v1205, %v1216
          %v1230 = vmul.f32 %v1206, %v1221
          %v1231 = vmul.f32 %v1207, %v1226
          %1232 = vst.msk [vmem:[%s390] sm:$0xff] %vm436, %v1228
          %1234 = vrot.lane.b32.xlu0 %v1229, 32
          %v1235 = vpop.permute.xlu0 %1234
          %vm1237 = vcmask 523520
          %1238 = vst.msk [vmem:[%s390] sm:$0xff] %vm1237, %v1235
          %1240 = vrot.lane.b32.xlu0 %v1230, 64
          %v1241 = vpop.permute.xlu0 %1240
          %vm1243 = vcmask 785920
          %1244 = vst.msk [vmem:[%s390] sm:$0xff] %vm1243, %v1241
          %1246 = vrot.lane.b32.xlu0 %v1231, 96
          %v1247 = vpop.permute.xlu0 %1246
          %vm1249 = vcmask 1048320
          %1250 = vst.msk [vmem:[%s390] sm:$0xff] %vm1249, %v1247
        $region60: #{tpu_custom_call.1} parent=39 // pred_fallthru
          _
        %s1251 = sand.u32 %s196, 1
        %s1252 = scalar_lea.sflag [#allocation7], %s1251
        %s1253 = sand.u32 %s196, 1
        %s1254 = smul.addr %s1253, 8
        %s1255 = scalar_lea.vmem [#allocation11], %s1254
        // Predicated region
        $region61: #{tpu_custom_call.1} parent=39 // pred_check
          %p1256 = pneg %p206
        $region62: #{tpu_custom_call.1} parent=39 // pred_check_branch
          %1258 = sbr.rel (%p1256) target = $region64
        $region63: #{tpu_custom_call.1} parent=39 // pred_region
          %s1260 = ssub.s32 128, 128
          %1261 = vsyncadd %s1252, %s1260
          %s1262 = sadd.s32 %s31, %s30
          %s1263 = smul.addr %s1262, 128
          %s1264 = scalar_lea.hbm %s5, %s1263
          %s1266 = sshll.u32 %s1255, 4
          %s1267 = int_to_ptr.vmem [resolvable:$true] %s1266
          %1269 = dma.vmem_to_hbm [thread:$0]  %s1267, 128, %s1264, %s1252
        $region64: #{tpu_custom_call.1} parent=39 // pred_fallthru
          _
      $region40: #{tpu_custom_call.1} parent=5 // pred_fallthru
        _
      %p1270 = scmp.le.s32.totalorder 2, %s20
      // Predicated region
      $region65: #{tpu_custom_call.1} parent=5 // pred_check
        %p1271 = pneg %p1270
      $region66: #{tpu_custom_call.1} parent=5 // pred_check_branch
        %1273 = sbr.rel (%p1271) target = $region68
      $region67: #{tpu_custom_call.1} parent=5 // pred_region
        %s1274 = ssub.s32 %s20, 2
        // Predicated region
        $region69: #{tpu_custom_call.1} parent=67 // pred_check
          %p1275 = pneg %p212
        $region70: #{tpu_custom_call.1} parent=67 // pred_check_branch
          %1277 = sbr.rel (%p1275) target = $region72
        $region71: #{tpu_custom_call.1} parent=67 // pred_region
          %s1278 = sand.u32 %s197, 1
          %s1279 = scalar_lea.sflag [#allocation7], %s1278
          %s1280 = sand.u32 %s197, 1
          %s1281 = smul.addr %s1280, 8
          %s1282 = scalar_lea.vmem [#allocation11], %s1281
          %1283 = dma.done %s1279, 128
        $region72: #{tpu_custom_call.1} parent=67 // pred_fallthru
          _
      $region68: #{tpu_custom_call.1} parent=5 // pred_fallthru
        _
    $region6: #{tpu_custom_call.1} parent=1 // loop_footer
      %s24 = sadd.s32 1, %s20
    $region7: #{tpu_custom_call.1} parent=1 // loop_footer_branch
      %19 = sbr.rel target = $region3
    $region8: #{tpu_custom_call.1} parent=1 // loop_exit
      _
    %1284 = vsyncpa [#allocation6], 1
    %s1285 = scalar_lea.sflag [#allocation6], 1
    %1286 = vsyncpa %s1285, 1
    %1287 = vsyncpa [#allocation9], 1
    %s1288 = scalar_lea.sflag [#allocation9], 1
    %1289 = vsyncpa %s1288, 1
    %1290 = vsyncpa [#allocation7], 1
    %s1291 = scalar_lea.sflag [#allocation7], 1
    %1292 = vsyncpa %s1291, 1

</llo_original>
